<compile_context>
chip_gen: v7x
topology: tpu7x:2x2x1
jax: 0.10.0
libtpu: 0.0.40
codegen_flags: <defaults>
</compile_context>

<pallas_src>
import functools

import jax
import jax.numpy as jnp
from jax import lax
from jax.experimental import pallas as pl
from jax.experimental.pallas import tpu as pltpu


def _round_up(x, m):
    return ((x + m - 1) // m) * m


# -----------------------------------------------------------------------------
# Fused kernel: pool(keys) -> k-proj -> kT (once per batch), seqs -> q-proj,
# per-head energy, tanh-form sigmoid, module-layout stores.
# -----------------------------------------------------------------------------
def _p_choose_kernel(seqs_ref, keys_ref, qw_ref, qb_ref, kw_ref, kb_ref,
                     out_ref, kt_ref, *, num_layers, num_heads, head_dim,
                     s_k, s_kp, s_kp_pad, ratio, a2, c2, mxu_dtype):
    def project(x, w_ref, b_ref):
        # x: (T, D) f32.  L x (Linear + ReLU); MXU inputs in mxu_dtype,
        # accumulation + bias + ReLU in f32.
        for l in range(num_layers):                    # static unroll, L small
            y = jnp.dot(x.astype(mxu_dtype), w_ref[l],
                        preferred_element_type=jnp.float32)
            x = jnp.maximum(y + b_ref[l], 0.0)
        return x                                       # f32

    # ---- k branch: AvgPool1d(ceil_mode) + projection, ONCE per batch -------
    @pl.when(pl.program_id(1) == 0)
    def _():
        # Strided VPU sums replace the former dense (S_kp, S_k) pooling matmul.
        acc = None
        for off in range(ratio):                       # static unroll, r small
            n_off = -(-(s_k - off) // ratio)           # windows containing `off`
            if n_off <= 0:
                continue
            part = keys_ref[pl.ds(off, n_off, stride=ratio), :].astype(jnp.float32)
            if n_off < s_kp:                           # last (partial) window
                part = jnp.concatenate(
                    [part, jnp.zeros((s_kp - n_off, part.shape[-1]), jnp.float32)],
                    axis=0)
            acc = part if acc is None else acc + part

        rem = s_k - (s_kp - 1) * ratio                 # size of the last window
        if rem == ratio:                               # static config branch
            pooled = acc * (1.0 / ratio)
        else:
            row = lax.broadcasted_iota(jnp.int32, (s_kp, 1), 0)
            pooled = acc * jnp.where(row == s_kp - 1, 1.0 / rem, 1.0 / ratio)

        k = project(pooled, kw_ref, kb_ref)            # (s_kp, D) f32
        if s_kp_pad > s_kp:                            # pad to lane multiple of 128
            k = jnp.concatenate(
                [k, jnp.zeros((s_kp_pad - s_kp, k.shape[-1]), jnp.float32)],
                axis=0)
        # One transpose so every per-head energy matmul is a plain NN matmul.
        kt_ref[...] = k.T.astype(mxu_dtype)            # (D, s_kp_pad), persists

    # ---- q branch -----------------------------------------------------------
    q = project(seqs_ref[...].astype(jnp.float32), qw_ref, qb_ref)  # (TQ, D)
    qm = q.astype(mxu_dtype)

    # ---- per-head energy + sigmoid, lane-dense per-head stores --------------
    for h in range(num_heads):                         # static unroll
        lo = h * head_dim
        e = jnp.dot(qm[:, lo:lo + head_dim],
                    kt_ref[lo:lo + head_dim, :],
                    preferred_element_type=jnp.float32)       # (TQ, s_kp_pad)
        # sigmoid(z) == 0.5*tanh(z/2) + 0.5; 0.5 pre-folded into a2/c2 (1 EUP op)
        out_ref[h] = (0.5 * jnp.tanh(e * a2 + c2) + 0.5).astype(out_ref.dtype)


# -----------------------------------------------------------------------------
# Wrapper
# -----------------------------------------------------------------------------
def p_choose_layer_forward(seqs, keys, params, *, num_heads, energy_bias_value,
                           monotonic_temperature, pre_decision_ratio,
                           mxu_dtype=jnp.bfloat16, out_dtype=jnp.float32,
                           q_tile=512):
    N, S_q, D = seqs.shape
    Nk, S_k, Dk = keys.shape
    assert Nk == N and Dk == D
    assert D % num_heads == 0, "model_dim must be divisible by num_heads"
    head_dim = D // num_heads
    L = int(params["q_w"].shape[0])
    r = int(pre_decision_ratio)
    s_kp = -(-S_k // r)                               # ceil(S_k / r)
    s_kp_pad = _round_up(s_kp, 128)                   # lane-dense per-head slabs

    # q-tile: S_q itself if it fits, else the largest multiple of 8 <= q_tile
    # dividing S_q (keeps blocks bounded for long sequences).
    if S_q <= q_tile:
        tq = S_q
    else:
        tq = S_q
        for t in range(q_tile, 7, -8):
            if S_q % t == 0:
                tq = t
                break
    n_qt = S_q // tq

    # Constants folded for the tanh-form sigmoid: p = 0.5*tanh(e*a2 + c2) + 0.5
    a2 = 0.5 * float(head_dim) ** -0.5 / float(monotonic_temperature)
    c2 = 0.5 * float(energy_bias_value) / float(monotonic_temperature)

    # Only the resident weights are pre-cast; activations stay in native dtype
    # (cast happens in-kernel right at the MXU input).
    q_w = params["q_w"].astype(mxu_dtype)
    k_w = params["k_w"].astype(mxu_dtype)
    q_b = params["q_b"].reshape(L, 1, D).astype(jnp.float32)
    k_b = params["k_b"].reshape(L, 1, D).astype(jnp.float32)

    # ---- VMEM budget from actual block sizes --------------------------------
    mxu_b = jnp.dtype(mxu_dtype).itemsize
    out_b = jnp.dtype(out_dtype).itemsize
    est = (
        2 * tq * D * jnp.dtype(seqs.dtype).itemsize          # seqs block (x2 buf)
        + 2 * S_k * D * jnp.dtype(keys.dtype).itemsize       # keys block (x2 buf)
        + 2 * L * D * D * mxu_b                               # q_w + k_w (Buffered(1))
        + 2 * L * 8 * D * 4                                   # biases (sublane-padded)
        + 2 * num_heads * tq * s_kp_pad * out_b               # out block (x2 buf)
        + D * s_kp_pad * mxu_b                                # kT scratch
        + 4 * (tq * D + s_kp_pad * D + tq * s_kp_pad) * 4     # live activations
    )
    vmem_limit = int(min(96 * 2 ** 20, max(16 * 2 ** 20, 2 * est)))

    flops = int(2 * N * (L * (S_q + s_kp) * D * D + S_q * s_kp_pad * D))
    transcendentals = int(N * num_heads * S_q * s_kp_pad)
    bytes_accessed = int(
        seqs.size * jnp.dtype(seqs.dtype).itemsize
        + keys.size * jnp.dtype(keys.dtype).itemsize
        + (q_w.size + k_w.size) * mxu_b + (q_b.size + k_b.size) * 4
        + N * num_heads * S_q * s_kp_pad * out_b)

    kernel = functools.partial(
        _p_choose_kernel, num_layers=L, num_heads=num_heads, head_dim=head_dim,
        s_k=S_k, s_kp=s_kp, s_kp_pad=s_kp_pad, ratio=r, a2=a2, c2=c2,
        mxu_dtype=mxu_dtype)

    resident = dict(pipeline_mode=pl.Buffered(1))     # constant index_map -> 1 buffer
    out_pad = pl.pallas_call(
        kernel,
        out_shape=jax.ShapeDtypeStruct((N, num_heads, S_q, s_kp_pad), out_dtype),
        grid=(N, n_qt),
        in_specs=[
            pl.BlockSpec((None, tq, D), lambda i, j: (i, j, 0)),    # seqs (per q-tile)
            pl.BlockSpec((None, S_k, D), lambda i, j: (i, 0, 0)),   # keys (per batch)
            pl.BlockSpec((L, D, D), lambda i, j: (0, 0, 0), **resident),  # q weights
            pl.BlockSpec((L, 1, D), lambda i, j: (0, 0, 0), **resident),  # q biases
            pl.BlockSpec((L, D, D), lambda i, j: (0, 0, 0), **resident),  # k weights
            pl.BlockSpec((L, 1, D), lambda i, j: (0, 0, 0), **resident),  # k biases
        ],
        out_specs=pl.BlockSpec((None, num_heads, tq, s_kp_pad),
                               lambda i, j: (i, 0, j, 0)),
        scratch_shapes=[pltpu.VMEM((D, s_kp_pad), mxu_dtype)],      # kT, per batch
        compiler_params=pltpu.CompilerParams(
            dimension_semantics=("parallel", "arbitrary"),
            vmem_limit_bytes=vmem_limit),
        cost_estimate=pl.CostEstimate(flops=flops,
                                      transcendentals=transcendentals,
                                      bytes_accessed=bytes_accessed),
    )(seqs, keys, q_w, q_b, k_w, k_b)

    # Slice off the lane padding (identity when S_kp is a multiple of 128).
    return out_pad[..., :s_kp] if s_kp_pad != s_kp else out_pad


# -----------------------------------------------------------------------------
# Pure-JAX reference (faithful to the PyTorch module) for self-check
# -----------------------------------------------------------------------------
def _avg_pool1d_ceil(x, r):
    N, S, D = x.shape
    s_out = -(-S // r)
    pad = s_out * r - S
    xp = jnp.pad(x, ((0, 0), (0, pad), (0, 0)))
    sums = xp.reshape(N, s_out, r, D).sum(axis=2)
    starts = jnp.arange(s_out) * r
    counts = jnp.minimum(starts + r, S) - starts
    return sums / counts[None, :, None].astype(x.dtype)


def reference_forward(seqs, keys, params, *, num_heads, energy_bias_value,
                      monotonic_temperature, pre_decision_ratio):
    N, S_q, D = seqs.shape
    head_dim = D // num_heads

    def proj(x, ws, bs):
        for l in range(ws.shape[0]):
            x = jnp.maximum(x @ ws[l] + bs[l], 0.0)
        return x

    q = proj(seqs, params["q_w"], params["q_b"])
    q = q.reshape(N, S_q, num_heads, head_dim).transpose(0, 2, 1, 3)
    pk = _avg_pool1d_ceil(keys, pre_decision_ratio)
    k = proj(pk, params["k_w"], params["k_b"])
    k = k.reshape(N, -1, num_heads, head_dim).transpose(0, 2, 1, 3)
    e = jnp.einsum("nhqd,nhkd->nhqk", q, k) * head_dim ** -0.5
    e = e + energy_bias_value
    return jax.nn.sigmoid(e / monotonic_temperature)


if __name__ == "__main__":
    model_dim = 32
    num_heads = 4
    energy_bias_value = -0.5
    monotonic_temperature = 0.2
    num_monotonic_energy_layers = 2
    pre_decision_ratio = 4

    key = jax.random.PRNGKey(0)
    _, k_qw, k_qb, k_kw, k_kb = jax.random.split(key, 5)

    # Weights stored as (L, D, D) with y = x @ W[l] + b[l]
    # (PyTorch Linear weight already transposed).
    L = num_monotonic_energy_layers
    wscale = model_dim ** -0.5
    params = {
        "q_w": jax.random.normal(k_qw, (L, model_dim, model_dim), jnp.float32) * wscale,
        "q_b": jax.random.normal(k_qb, (L, model_dim), jnp.float32) * 0.1,
        "k_w": jax.random.normal(k_kw, (L, model_dim, model_dim), jnp.float32) * wscale,
        "k_b": jax.random.normal(k_kb, (L, model_dim), jnp.float32) * 0.1,
    }

    hp = dict(num_heads=num_heads, energy_bias_value=energy_bias_value,
              monotonic_temperature=monotonic_temperature,
              pre_decision_ratio=pre_decision_ratio)

    def run_case(batch, s_q, s_k, mxu_dtype, q_tile, atol):
        ks, kk = jax.random.split(jax.random.fold_in(key, 1000 * s_q + s_k), 2)
        seqs = jax.random.normal(ks, (batch, s_q, model_dim), jnp.float32)
        keys = jax.random.normal(kk, (batch, s_k, model_dim), jnp.float32)
        ref = reference_forward(seqs, keys, params, **hp)
        out = jax.block_until_ready(
            p_choose_layer_forward(seqs, keys, params, mxu_dtype=mxu_dtype,
                                   q_tile=q_tile, **hp))
        s_kp = -(-s_k // pre_decision_ratio)
        assert out.shape == (batch, num_heads, s_q, s_kp), out.shape
        err = float(jnp.max(jnp.abs(out - ref)))
        assert err < atol, f"max abs err {err} vs atol {atol}"

    # f32 MXU path (strict check).
    run_case(2, 8, 16, jnp.float32, 512, 1e-4)
    # bf16 MXU path (default; f32 accumulation) — loose check.
    run_case(2, 8, 16, jnp.bfloat16, 512, 5e-2)
    # ceil_mode pooling (S_k % r != 0) + S_q tiling (2 q-tiles, k scratch reuse).
    run_case(2, 16, 14, jnp.float32, 8, 1e-4)

    print("KERNEL_OK")
</pallas_src>

<mosaic_0001>
module attributes {stable_mosaic.version = 11 : i64} {
  func.func @_p_choose_kernel(%arg0: i32, %arg1: i32, %arg2: memref<1x8x32xf32, #tpu.memory_space<vmem>>, %arg3: memref<1x16x32xf32, #tpu.memory_space<vmem>>, %arg4: memref<2x32x32xf32, #tpu.memory_space<vmem>>, %arg5: memref<2x1x32xf32, #tpu.memory_space<vmem>>, %arg6: memref<2x32x32xf32, #tpu.memory_space<vmem>>, %arg7: memref<2x1x32xf32, #tpu.memory_space<vmem>>, %arg8: memref<1x4x8x128xf32, #tpu.memory_space<vmem>>, %arg9: memref<32x128xf32, #tpu.memory_space<vmem>>) attributes {dimension_semantics = [#tpu.dimension_semantics<parallel>, #tpu.dimension_semantics<arbitrary>], iteration_bounds = array<i64: 2, 1>, scalar_prefetch = 0 : i64, scratch_operands = 1 : i64, tpu.core_type = #tpu.core_type<tc>, window_params = [{transform_indices = @transform_0, window_bounds = array<i64: 1, 8, 32>}, {transform_indices = @transform_1, window_bounds = array<i64: 1, 16, 32>}, {pipeline_mode = #tpu.pipeline_mode<synchronous>, transform_indices = @transform_2, window_bounds = array<i64: 2, 32, 32>}, {pipeline_mode = #tpu.pipeline_mode<synchronous>, transform_indices = @transform_3, window_bounds = array<i64: 2, 1, 32>}, {pipeline_mode = #tpu.pipeline_mode<synchronous>, transform_indices = @transform_4, window_bounds = array<i64: 2, 32, 32>}, {pipeline_mode = #tpu.pipeline_mode<synchronous>, transform_indices = @transform_5, window_bounds = array<i64: 2, 1, 32>}, {transform_indices = @transform_6, window_bounds = array<i64: 1, 4, 8, 128>}]} {
    %c0_i32 = arith.constant 0 : i32
    %0 = arith.cmpi eq, %arg1, %c0_i32 : i32
    %1 = arith.extui %0 : i1 to i32
    %c0_i32_0 = arith.constant 0 : i32
    %2 = arith.cmpi ne, %1, %c0_i32_0 : i32
    scf.if %2 {
      %c0_56 = arith.constant 0 : index
      %c0_57 = arith.constant 0 : index
      %c0_58 = arith.constant 0 : index
      %83 = tpu.strided_load %arg3[%c0_56, %c0_57, %c0_58] {strides = array<i32: 1, 4, 1>} : memref<1x16x32xf32, #tpu.memory_space<vmem>>, vector<1x4x32xf32>
      %84 = vector.shape_cast %83 : vector<1x4x32xf32> to vector<4x32xf32>
      %c0_59 = arith.constant 0 : index
      %c1_60 = arith.constant 1 : index
      %c0_61 = arith.constant 0 : index
      %85 = tpu.strided_load %arg3[%c0_59, %c1_60, %c0_61] {strides = array<i32: 1, 4, 1>} : memref<1x16x32xf32, #tpu.memory_space<vmem>>, vector<1x4x32xf32>
      %86 = vector.shape_cast %85 : vector<1x4x32xf32> to vector<4x32xf32>
      %87 = arith.addf %84, %86 : vector<4x32xf32>
      %c0_62 = arith.constant 0 : index
      %c2_63 = arith.constant 2 : index
      %c0_64 = arith.constant 0 : index
      %88 = tpu.strided_load %arg3[%c0_62, %c2_63, %c0_64] {strides = array<i32: 1, 4, 1>} : memref<1x16x32xf32, #tpu.memory_space<vmem>>, vector<1x4x32xf32>
      %89 = vector.shape_cast %88 : vector<1x4x32xf32> to vector<4x32xf32>
      %90 = arith.addf %87, %89 : vector<4x32xf32>
      %c0_65 = arith.constant 0 : index
      %c3_66 = arith.constant 3 : index
      %c0_67 = arith.constant 0 : index
      %91 = tpu.strided_load %arg3[%c0_65, %c3_66, %c0_67] {strides = array<i32: 1, 4, 1>} : memref<1x16x32xf32, #tpu.memory_space<vmem>>, vector<1x4x32xf32>
      %92 = vector.shape_cast %91 : vector<1x4x32xf32> to vector<4x32xf32>
      %93 = arith.addf %90, %92 : vector<4x32xf32>
      %cst_68 = arith.constant 2.500000e-01 : f32
      %94 = vector.broadcast %cst_68 : f32 to vector<4x32xf32>
      %95 = arith.mulf %93, %94 : vector<4x32xf32>
      %c0_69 = arith.constant 0 : index
      %c0_70 = arith.constant 0 : index
      %c0_71 = arith.constant 0 : index
      %96 = vector.load %arg6[%c0_69, %c0_70, %c0_71] : memref<2x32x32xf32, #tpu.memory_space<vmem>>, vector<1x32x32xf32>
      %97 = vector.shape_cast %96 : vector<1x32x32xf32> to vector<32x32xf32>
      %cst_72 = arith.constant dense<0.000000e+00> : vector<4x32xf32>
      %98 = tpu.matmul %95, %97, %cst_72 {dimension_numbers = #tpu.dot_dimension_numbers<[1], [0], [0], [1], [0, 0, 1, 1], [], []>} : vector<4x32xf32>, vector<32x32xf32>, vector<4x32xf32> -> vector<4x32xf32>
      %c0_73 = arith.constant 0 : index
      %c0_74 = arith.constant 0 : index
      %c0_75 = arith.constant 0 : index
      %99 = vector.load %arg7[%c0_73, %c0_74, %c0_75] : memref<2x1x32xf32, #tpu.memory_space<vmem>>, vector<1x1x32xf32>
      %100 = vector.shape_cast %99 : vector<1x1x32xf32> to vector<1x32xf32>
      %101 = vector.broadcast %100 : vector<1x32xf32> to vector<4x32xf32>
      %102 = arith.addf %98, %101 : vector<4x32xf32>
      %cst_76 = arith.constant 0.000000e+00 : f32
      %103 = vector.broadcast %cst_76 : f32 to vector<4x32xf32>
      %104 = arith.maximumf %102, %103 : vector<4x32xf32>
      %c1_77 = arith.constant 1 : index
      %c0_78 = arith.constant 0 : index
      %c0_79 = arith.constant 0 : index
      %105 = vector.load %arg6[%c1_77, %c0_78, %c0_79] : memref<2x32x32xf32, #tpu.memory_space<vmem>>, vector<1x32x32xf32>
      %106 = vector.shape_cast %105 : vector<1x32x32xf32> to vector<32x32xf32>
      %cst_80 = arith.constant dense<0.000000e+00> : vector<4x32xf32>
      %107 = tpu.matmul %104, %106, %cst_80 {dimension_numbers = #tpu.dot_dimension_numbers<[1], [0], [0], [1], [0, 0, 1, 1], [], []>} : vector<4x32xf32>, vector<32x32xf32>, vector<4x32xf32> -> vector<4x32xf32>
      %c1_81 = arith.constant 1 : index
      %c0_82 = arith.constant 0 : index
      %c0_83 = arith.constant 0 : index
      %108 = vector.load %arg7[%c1_81, %c0_82, %c0_83] : memref<2x1x32xf32, #tpu.memory_space<vmem>>, vector<1x1x32xf32>
      %109 = vector.shape_cast %108 : vector<1x1x32xf32> to vector<1x32xf32>
      %110 = vector.broadcast %109 : vector<1x32xf32> to vector<4x32xf32>
      %111 = arith.addf %107, %110 : vector<4x32xf32>
      %cst_84 = arith.constant 0.000000e+00 : f32
      %112 = vector.broadcast %cst_84 : f32 to vector<4x32xf32>
      %113 = arith.maximumf %111, %112 : vector<4x32xf32>
      %cst_85 = arith.constant 0.000000e+00 : f32
      %114 = vector.broadcast %cst_85 : f32 to vector<124x32xf32>
      %115 = tpu.concatenate %113, %114 in 0 : vector<4x32xf32>, vector<124x32xf32> -> vector<128x32xf32>
      %116 = tpu.transpose %115, [1, 0] : vector<128x32xf32> -> vector<32x128xf32>
      %c0_86 = arith.constant 0 : index
      %c0_87 = arith.constant 0 : index
      %117 = vector.load %arg9[%c0_86, %c0_87] : memref<32x128xf32, #tpu.memory_space<vmem>>, vector<32x128xf32>
      tpu.vector_store %arg9[%c0_86, %c0_87], %116 {strides = array<i32>} : memref<32x128xf32, #tpu.memory_space<vmem>>, vector<32x128xf32>,
    } else {
    }
    %c0 = arith.constant 0 : index
    %c0_1 = arith.constant 0 : index
    %c0_2 = arith.constant 0 : index
    %3 = vector.load %arg2[%c0, %c0_1, %c0_2] : memref<1x8x32xf32, #tpu.memory_space<vmem>>, vector<1x8x32xf32>
    %4 = vector.shape_cast %3 : vector<1x8x32xf32> to vector<8x32xf32>
    %c0_3 = arith.constant 0 : index
    %c0_4 = arith.constant 0 : index
    %c0_5 = arith.constant 0 : index
    %5 = vector.load %arg4[%c0_3, %c0_4, %c0_5] : memref<2x32x32xf32, #tpu.memory_space<vmem>>, vector<1x32x32xf32>
    %6 = vector.shape_cast %5 : vector<1x32x32xf32> to vector<32x32xf32>
    %cst = arith.constant dense<0.000000e+00> : vector<8x32xf32>
    %7 = tpu.matmul %4, %6, %cst {dimension_numbers = #tpu.dot_dimension_numbers<[1], [0], [0], [1], [0, 0, 1, 1], [], []>} : vector<8x32xf32>, vector<32x32xf32>, vector<8x32xf32> -> vector<8x32xf32>
    %c0_6 = arith.constant 0 : index
    %c0_7 = arith.constant 0 : index
    %c0_8 = arith.constant 0 : index
    %8 = vector.load %arg5[%c0_6, %c0_7, %c0_8] : memref<2x1x32xf32, #tpu.memory_space<vmem>>, vector<1x1x32xf32>
    %9 = vector.shape_cast %8 : vector<1x1x32xf32> to vector<1x32xf32>
    %10 = vector.broadcast %9 : vector<1x32xf32> to vector<8x32xf32>
    %11 = arith.addf %7, %10 : vector<8x32xf32>
    %cst_9 = arith.constant 0.000000e+00 : f32
    %12 = vector.broadcast %cst_9 : f32 to vector<8x32xf32>
    %13 = arith.maximumf %11, %12 : vector<8x32xf32>
    %c1 = arith.constant 1 : index
    %c0_10 = arith.constant 0 : index
    %c0_11 = arith.constant 0 : index
    %14 = vector.load %arg4[%c1, %c0_10, %c0_11] : memref<2x32x32xf32, #tpu.memory_space<vmem>>, vector<1x32x32xf32>
    %15 = vector.shape_cast %14 : vector<1x32x32xf32> to vector<32x32xf32>
    %cst_12 = arith.constant dense<0.000000e+00> : vector<8x32xf32>
    %16 = tpu.matmul %13, %15, %cst_12 {dimension_numbers = #tpu.dot_dimension_numbers<[1], [0], [0], [1], [0, 0, 1, 1], [], []>} : vector<8x32xf32>, vector<32x32xf32>, vector<8x32xf32> -> vector<8x32xf32>
    %c1_13 = arith.constant 1 : index
    %c0_14 = arith.constant 0 : index
    %c0_15 = arith.constant 0 : index
    %17 = vector.load %arg5[%c1_13, %c0_14, %c0_15] : memref<2x1x32xf32, #tpu.memory_space<vmem>>, vector<1x1x32xf32>
    %18 = vector.shape_cast %17 : vector<1x1x32xf32> to vector<1x32xf32>
    %19 = vector.broadcast %18 : vector<1x32xf32> to vector<8x32xf32>
    %20 = arith.addf %16, %19 : vector<8x32xf32>
    %cst_16 = arith.constant 0.000000e+00 : f32
    %21 = vector.broadcast %cst_16 : f32 to vector<8x32xf32>
    %22 = arith.maximumf %20, %21 : vector<8x32xf32>
    %23 = vector.extract_strided_slice %22 {offsets = [0, 0], sizes = [8, 8], strides = [1, 1]} : vector<8x32xf32> to vector<8x8xf32>
    %c0_17 = arith.constant 0 : index
    %c0_18 = arith.constant 0 : index
    %24 = vector.load %arg9[%c0_17, %c0_18] : memref<32x128xf32, #tpu.memory_space<vmem>>, vector<8x128xf32>
    %cst_19 = arith.constant dense<0.000000e+00> : vector<8x128xf32>
    %25 = tpu.matmul %23, %24, %cst_19 {dimension_numbers = #tpu.dot_dimension_numbers<[1], [0], [0], [1], [0, 0, 1, 1], [], []>} : vector<8x8xf32>, vector<8x128xf32>, vector<8x128xf32> -> vector<8x128xf32>
    %cst_20 = arith.constant 0.883883476 : f32
    %26 = vector.broadcast %cst_20 : f32 to vector<8x128xf32>
    %27 = arith.mulf %25, %26 : vector<8x128xf32>
    %cst_21 = arith.constant -1.250000e+00 : f32
    %28 = vector.broadcast %cst_21 : f32 to vector<8x128xf32>
    %29 = arith.addf %27, %28 : vector<8x128xf32>
    %30 = math.tanh %29 : vector<8x128xf32>
    %cst_22 = arith.constant 5.000000e-01 : f32
    %31 = vector.broadcast %cst_22 : f32 to vector<8x128xf32>
    %32 = arith.mulf %31, %30 : vector<8x128xf32>
    %cst_23 = arith.constant 5.000000e-01 : f32
    %33 = vector.broadcast %cst_23 : f32 to vector<8x128xf32>
    %34 = arith.addf %32, %33 : vector<8x128xf32>
    %c0_24 = arith.constant 0 : index
    %c0_25 = arith.constant 0 : index
    %c0_26 = arith.constant 0 : index
    %c0_27 = arith.constant 0 : index
    %35 = vector.load %arg8[%c0_24, %c0_25, %c0_26, %c0_27] : memref<1x4x8x128xf32, #tpu.memory_space<vmem>>, vector<1x1x8x128xf32>
    %36 = vector.shape_cast %35 : vector<1x1x8x128xf32> to vector<8x128xf32>
    %37 = vector.shape_cast %34 : vector<8x128xf32> to vector<1x1x8x128xf32>
    tpu.vector_store %arg8[%c0_24, %c0_25, %c0_26, %c0_27], %37 {strides = array<i32>} : memref<1x4x8x128xf32, #tpu.memory_space<vmem>>, vector<1x1x8x128xf32>,
    %38 = vector.extract_strided_slice %22 {offsets = [0, 8], sizes = [8, 8], strides = [1, 1]} : vector<8x32xf32> to vector<8x8xf32>
    %c8 = arith.constant 8 : index
    %c0_28 = arith.constant 0 : index
    %39 = vector.load %arg9[%c8, %c0_28] : memref<32x128xf32, #tpu.memory_space<vmem>>, vector<8x128xf32>
    %cst_29 = arith.constant dense<0.000000e+00> : vector<8x128xf32>
    %40 = tpu.matmul %38, %39, %cst_29 {dimension_numbers = #tpu.dot_dimension_numbers<[1], [0], [0], [1], [0, 0, 1, 1], [], []>} : vector<8x8xf32>, vector<8x128xf32>, vector<8x128xf32> -> vector<8x128xf32>
    %cst_30 = arith.constant 0.883883476 : f32
    %41 = vector.broadcast %cst_30 : f32 to vector<8x128xf32>
    %42 = arith.mulf %40, %41 : vector<8x128xf32>
    %cst_31 = arith.constant -1.250000e+00 : f32
    %43 = vector.broadcast %cst_31 : f32 to vector<8x128xf32>
    %44 = arith.addf %42, %43 : vector<8x128xf32>
    %45 = math.tanh %44 : vector<8x128xf32>
    %cst_32 = arith.constant 5.000000e-01 : f32
    %46 = vector.broadcast %cst_32 : f32 to vector<8x128xf32>
    %47 = arith.mulf %46, %45 : vector<8x128xf32>
    %cst_33 = arith.constant 5.000000e-01 : f32
    %48 = vector.broadcast %cst_33 : f32 to vector<8x128xf32>
    %49 = arith.addf %47, %48 : vector<8x128xf32>
    %c0_34 = arith.constant 0 : index
    %c1_35 = arith.constant 1 : index
    %c0_36 = arith.constant 0 : index
    %c0_37 = arith.constant 0 : index
    %50 = vector.load %arg8[%c0_34, %c1_35, %c0_36, %c0_37] : memref<1x4x8x128xf32, #tpu.memory_space<vmem>>, vector<1x1x8x128xf32>
    %51 = vector.shape_cast %50 : vector<1x1x8x128xf32> to vector<8x128xf32>
    %52 = vector.shape_cast %49 : vector<8x128xf32> to vector<1x1x8x128xf32>
    tpu.vector_store %arg8[%c0_34, %c1_35, %c0_36, %c0_37], %52 {strides = array<i32>} : memref<1x4x8x128xf32, #tpu.memory_space<vmem>>, vector<1x1x8x128xf32>,
    %53 = vector.extract_strided_slice %22 {offsets = [0, 16], sizes = [8, 8], strides = [1, 1]} : vector<8x32xf32> to vector<8x8xf32>
    %c16 = arith.constant 16 : index
    %c0_38 = arith.constant 0 : index
    %54 = vector.load %arg9[%c16, %c0_38] : memref<32x128xf32, #tpu.memory_space<vmem>>, vector<8x128xf32>
    %cst_39 = arith.constant dense<0.000000e+00> : vector<8x128xf32>
    %55 = tpu.matmul %53, %54, %cst_39 {dimension_numbers = #tpu.dot_dimension_numbers<[1], [0], [0], [1], [0, 0, 1, 1], [], []>} : vector<8x8xf32>, vector<8x128xf32>, vector<8x128xf32> -> vector<8x128xf32>
    %cst_40 = arith.constant 0.883883476 : f32
    %56 = vector.broadcast %cst_40 : f32 to vector<8x128xf32>
    %57 = arith.mulf %55, %56 : vector<8x128xf32>
    %cst_41 = arith.constant -1.250000e+00 : f32
    %58 = vector.broadcast %cst_41 : f32 to vector<8x128xf32>
    %59 = arith.addf %57, %58 : vector<8x128xf32>
    %60 = math.tanh %59 : vector<8x128xf32>
    %cst_42 = arith.constant 5.000000e-01 : f32
    %61 = vector.broadcast %cst_42 : f32 to vector<8x128xf32>
    %62 = arith.mulf %61, %60 : vector<8x128xf32>
    %cst_43 = arith.constant 5.000000e-01 : f32
    %63 = vector.broadcast %cst_43 : f32 to vector<8x128xf32>
    %64 = arith.addf %62, %63 : vector<8x128xf32>
    %c0_44 = arith.constant 0 : index
    %c2 = arith.constant 2 : index
    %c0_45 = arith.constant 0 : index
    %c0_46 = arith.constant 0 : index
    %65 = vector.load %arg8[%c0_44, %c2, %c0_45, %c0_46] : memref<1x4x8x128xf32, #tpu.memory_space<vmem>>, vector<1x1x8x128xf32>
    %66 = vector.shape_cast %65 : vector<1x1x8x128xf32> to vector<8x128xf32>
    %67 = vector.shape_cast %64 : vector<8x128xf32> to vector<1x1x8x128xf32>
    tpu.vector_store %arg8[%c0_44, %c2, %c0_45, %c0_46], %67 {strides = array<i32>} : memref<1x4x8x128xf32, #tpu.memory_space<vmem>>, vector<1x1x8x128xf32>,
    %68 = vector.extract_strided_slice %22 {offsets = [0, 24], sizes = [8, 8], strides = [1, 1]} : vector<8x32xf32> to vector<8x8xf32>
    %c24 = arith.constant 24 : index
    %c0_47 = arith.constant 0 : index
    %69 = vector.load %arg9[%c24, %c0_47] : memref<32x128xf32, #tpu.memory_space<vmem>>, vector<8x128xf32>
    %cst_48 = arith.constant dense<0.000000e+00> : vector<8x128xf32>
    %70 = tpu.matmul %68, %69, %cst_48 {dimension_numbers = #tpu.dot_dimension_numbers<[1], [0], [0], [1], [0, 0, 1, 1], [], []>} : vector<8x8xf32>, vector<8x128xf32>, vector<8x128xf32> -> vector<8x128xf32>
    %cst_49 = arith.constant 0.883883476 : f32
    %71 = vector.broadcast %cst_49 : f32 to vector<8x128xf32>
    %72 = arith.mulf %70, %71 : vector<8x128xf32>
    %cst_50 = arith.constant -1.250000e+00 : f32
    %73 = vector.broadcast %cst_50 : f32 to vector<8x128xf32>
    %74 = arith.addf %72, %73 : vector<8x128xf32>
    %75 = math.tanh %74 : vector<8x128xf32>
    %cst_51 = arith.constant 5.000000e-01 : f32
    %76 = vector.broadcast %cst_51 : f32 to vector<8x128xf32>
    %77 = arith.mulf %76, %75 : vector<8x128xf32>
    %cst_52 = arith.constant 5.000000e-01 : f32
    %78 = vector.broadcast %cst_52 : f32 to vector<8x128xf32>
    %79 = arith.addf %77, %78 : vector<8x128xf32>
    %c0_53 = arith.constant 0 : index
    %c3 = arith.constant 3 : index
    %c0_54 = arith.constant 0 : index
    %c0_55 = arith.constant 0 : index
    %80 = vector.load %arg8[%c0_53, %c3, %c0_54, %c0_55] : memref<1x4x8x128xf32, #tpu.memory_space<vmem>>, vector<1x1x8x128xf32>
    %81 = vector.shape_cast %80 : vector<1x1x8x128xf32> to vector<8x128xf32>
    %82 = vector.shape_cast %79 : vector<8x128xf32> to vector<1x1x8x128xf32>
    tpu.vector_store %arg8[%c0_53, %c3, %c0_54, %c0_55], %82 {strides = array<i32>} : memref<1x4x8x128xf32, #tpu.memory_space<vmem>>, vector<1x1x8x128xf32>,
    return
  }
  func.func @transform_0(%arg0: i32, %arg1: i32) -> (i32, i32, i32) {
    %c0_i32 = arith.constant 0 : i32
    %c0_i32_0 = arith.constant 0 : i32
    return %arg0, %arg1, %c0_i32 : i32, i32, i32
  }
  func.func @transform_1(%arg0: i32, %arg1: i32) -> (i32, i32, i32) {
    %c0_i32 = arith.constant 0 : i32
    %c0_i32_0 = arith.constant 0 : i32
    %c0_i32_1 = arith.constant 0 : i32
    return %arg0, %c0_i32, %c0_i32_0 : i32, i32, i32
  }
  func.func @transform_2(%arg0: i32, %arg1: i32) -> (i32, i32, i32) {
    %c0_i32 = arith.constant 0 : i32
    %c0_i32_0 = arith.constant 0 : i32
    %c0_i32_1 = arith.constant 0 : i32
    %c0_i32_2 = arith.constant 0 : i32
    return %c0_i32, %c0_i32_0, %c0_i32_1 : i32, i32, i32
  }
  func.func @transform_3(%arg0: i32, %arg1: i32) -> (i32, i32, i32) {
    %c0_i32 = arith.constant 0 : i32
    %c0_i32_0 = arith.constant 0 : i32
    %c0_i32_1 = arith.constant 0 : i32
    %c0_i32_2 = arith.constant 0 : i32
    return %c0_i32, %c0_i32_0, %c0_i32_1 : i32, i32, i32
  }
  func.func @transform_4(%arg0: i32, %arg1: i32) -> (i32, i32, i32) {
    %c0_i32 = arith.constant 0 : i32
    %c0_i32_0 = arith.constant 0 : i32
    %c0_i32_1 = arith.constant 0 : i32
    %c0_i32_2 = arith.constant 0 : i32
    return %c0_i32, %c0_i32_0, %c0_i32_1 : i32, i32, i32
  }
  func.func @transform_5(%arg0: i32, %arg1: i32) -> (i32, i32, i32) {
    %c0_i32 = arith.constant 0 : i32
    %c0_i32_0 = arith.constant 0 : i32
    %c0_i32_1 = arith.constant 0 : i32
    %c0_i32_2 = arith.constant 0 : i32
    return %c0_i32, %c0_i32_0, %c0_i32_1 : i32, i32, i32
  }
  func.func @transform_6(%arg0: i32, %arg1: i32) -> (i32, i32, i32, i32) {
    %c0_i32 = arith.constant 0 : i32
    %c0_i32_0 = arith.constant 0 : i32
    %c0_i32_1 = arith.constant 0 : i32
    return %arg0, %c0_i32, %arg1, %c0_i32_0 : i32, i32, i32, i32
  }
}

</mosaic_0001>

<llo_original>
// kernel: tpu_custom_call.1
$region0: #{tpu_custom_call.1}
  #allocation0 [shape = 'u32[]', space=smem, size = 0x4, offset = 0x4, fixed_abs, tag = 'smem constant byte address 0x4 - core index']
  #allocation1 [shape = 'u32[144,128]{1,0:T(1,128)}', space=vmem, size = 0x12000, scoped, tag = 'internal scratch']
  #allocation2 [shape = 'f32[32,128]{1,0:T(8,128)}', space=vmem, size = 0x4000, scoped, tag = 'scratch operand']
  %s0 = inlined_call_operand.hbm [shape: f32[2,8,32], index: 0, kind: input, shape index: {}]
  %s1 = inlined_call_operand.hbm [shape: f32[2,16,32], index: 1, kind: input, shape index: {}]
  %s2 = inlined_call_operand.hbm [shape: f32[2,32,32], index: 2, kind: input, shape index: {}]
  %s3 = inlined_call_operand.vmem [shape: f32[2,1,32], index: 3, kind: input, shape index: {}]
  %s4 = inlined_call_operand.hbm [shape: f32[2,32,32], index: 4, kind: input, shape index: {}]
  %s5 = inlined_call_operand.vmem [shape: f32[2,1,32], index: 5, kind: input, shape index: {}]
  %s6 = inlined_call_operand.hbm [shape: f32[2,4,8,128], index: 6, kind: output, shape index: {}]
  %s7 = sld [smem:[#allocation0]]
  $region77: #{tpu_custom_call.1} parent=0
    _
  %s9 = ssub.s32 1, %s7
  %s10 = scalar_select 0, %s9, %s7
  $region1: #{tpu_custom_call.1} parent=0
    #allocation3 [shape = 'u8[8192]{0}', space=vmem, size = 0x2000, scoped, tag = 'input window, operand 0']
    #allocation4 [shape = 's32[2]{0}', space=sflag, size = 0x8, scoped, tag = 'scoped memory for tpu_custom_call.1']
    #allocation5 [shape = 's32[2]{0}', space=sflag, size = 0x8, scoped, tag = 'scoped memory for tpu_custom_call.1']
    #allocation6 [shape = 'u8[16384]{0}', space=vmem, size = 0x4000, scoped, tag = 'input window, operand 1']
    #allocation7 [shape = 's32[2]{0}', space=sflag, size = 0x8, scoped, tag = 'scoped memory for tpu_custom_call.1']
    #allocation8 [shape = 'u8[32768]{0}', space=vmem, size = 0x8000, scoped, tag = 'input window, operand 2, single buffered']
    #allocation9 [shape = 'u8[32768]{0}', space=vmem, size = 0x8000, scoped, tag = 'input window, operand 4, single buffered']
    #allocation10 [shape = 's32[1]{0}', space=sflag, size = 0x4, scoped, tag = 'scoped memory for tpu_custom_call.1']
    #allocation11 [shape = 'u8[32768]{0}', space=vmem, size = 0x8000, scoped, tag = 'output window, operand 0']
    %11 = vsyncpa [#allocation4], 0
    %s12 = scalar_lea.sflag [#allocation4], 1
    %13 = vsyncpa %s12, 0
    %14 = vsyncpa [#allocation7], 0
    %s15 = scalar_lea.sflag [#allocation7], 1
    %16 = vsyncpa %s15, 0
    %17 = vsyncpa [#allocation10], 0
    %18 = vsyncpa [#allocation5], 0
    %s19 = scalar_lea.sflag [#allocation5], 1
    %20 = vsyncpa %s19, 0
    loop: start=0, step=1, limit=4
    $region2: #{tpu_custom_call.1} parent=1 // loop_pre_header
      _
    $region3: #{tpu_custom_call.1} parent=1 // loop_header
      %s22 = sphi 0, %s26
      %p23 = scmp.ge.s32.totalorder %s22, 4
      %s29 = sphi 0, %s41
      %s30 = sphi 0, %s37
      %s31 = sphi 0, %s29
      %s32 = sphi 0, %s30
      %s33 = sphi 0, %s31
      %s34 = sphi 0, %s32
      %s46 = sphi 0, %s48
      %s49 = sphi 0, %s46
      %s50 = sphi 0, %s49
      %s66 = sphi 0, %s50
      %s72 = sphi 0, %s74
      %s75 = sphi 0, %s72
      %s76 = sphi 0, %s75
      %s92 = sphi 0, %s76
      %s96 = sphi 0, %s96
      %s98 = sphi 0, %s96
      %s99 = sphi 0, %s98
      %s113 = sphi 0, %s99
      %s117 = sphi 0, %s117
      %s119 = sphi 0, %s117
      %s120 = sphi 0, %s119
      %s134 = sphi 0, %s120
      %s138 = sphi 0, %s138
      %s140 = sphi 0, %s138
      %s141 = sphi 0, %s140
      %s155 = sphi 0, %s141
      %s159 = sphi 0, %s159
      %s161 = sphi 0, %s159
      %s162 = sphi 0, %s161
      %s176 = sphi 0, %s162
      %s184 = sphi 0, %s186
      %s187 = sphi 0, %s184
      %s188 = sphi 0, %s187
      %s204 = sphi 0, %s188
    $region4: #{tpu_custom_call.1} parent=1 // loop_header_branch
      %25 = sbr.rel (%p23) target = $region8
    $region5: #{tpu_custom_call.1} parent=1 // loop_body
      %s27 = ssub.s32 %s22, 1
      %s28 = ssub.s32 %s22, 2
      %s35 = sadd.s32 1, %s30
      %p36 = scmp.ge.s32.totalorder %s35, 1
      %s37 = scalar_select %p36, 0, %s35
      %s38 = sadd.s32 1, %s29
      %s39 = scalar_select %p36, %s38, %s29
      %p40 = scmp.ge.s32.totalorder %s39, 2
      %s41 = scalar_select %p40, 0, %s39
      %s42 = ssub.s32 %s29, %s41
      %s43 = ssub.s32 %s30, %s37
      %s44 = sor.u32 %s42, %s43
      %p45 = scmp.eq.s32.totalorder %s44, 0
      %s47 = sadd.s32 %s46, 1
      %s48 = scalar_select %p45, %s46, %s47
      %p51 = pneg %p45
      %p52 = scmp.eq.s32.totalorder %s22, 1
      %p53 = por %p51, %p52
      %p54 = scmp.ne.s32.totalorder %s46, %s49
      %p55 = scmp.eq.s32.totalorder %s22, 0
      %p56 = por %p54, %p55
      %p57 = scmp.ne.s32.totalorder %s46, %s49
      %p58 = scmp.eq.s32.totalorder %s27, 1
      %p59 = por %p57, %p58
      %p60 = scmp.ne.s32.totalorder %s49, %s50
      %p61 = scmp.eq.s32.totalorder %s27, 0
      %p62 = por %p60, %p61
      %p63 = scmp.ne.s32.totalorder %s49, %s50
      %p64 = scmp.eq.s32.totalorder %s28, 1
      %p65 = por %p63, %p64
      %p67 = scmp.ne.s32.totalorder %s50, %s66
      %p68 = scmp.eq.s32.totalorder %s28, 0
      %p69 = por %p67, %p68
      %s70 = ssub.s32 %s29, %s41
      %p71 = scmp.eq.s32.totalorder %s70, 0
      %s73 = sadd.s32 %s72, 1
      %s74 = scalar_select %p71, %s72, %s73
      %p77 = pneg %p71
      %p78 = scmp.eq.s32.totalorder %s22, 1
      %p79 = por %p77, %p78
      %p80 = scmp.ne.s32.totalorder %s72, %s75
      %p81 = scmp.eq.s32.totalorder %s22, 0
      %p82 = por %p80, %p81
      %p83 = scmp.ne.s32.totalorder %s72, %s75
      %p84 = scmp.eq.s32.totalorder %s27, 1
      %p85 = por %p83, %p84
      %p86 = scmp.ne.s32.totalorder %s75, %s76
      %p87 = scmp.eq.s32.totalorder %s27, 0
      %p88 = por %p86, %p87
      %p89 = scmp.ne.s32.totalorder %s75, %s76
      %p90 = scmp.eq.s32.totalorder %s28, 1
      %p91 = por %p89, %p90
      %p93 = scmp.ne.s32.totalorder %s76, %s92
      %p94 = scmp.eq.s32.totalorder %s28, 0
      %p95 = por %p93, %p94
      %s97 = sadd.s32 %s96, 1
      %p100 = scmp.eq.s32.totalorder %s22, 1
      %p101 = scmp.ne.s32.totalorder %s96, %s98
      %p102 = scmp.eq.s32.totalorder %s22, 0
      %p103 = por %p101, %p102
      %p104 = scmp.ne.s32.totalorder %s96, %s98
      %p105 = scmp.eq.s32.totalorder %s27, 1
      %p106 = por %p104, %p105
      %p107 = scmp.ne.s32.totalorder %s98, %s99
      %p108 = scmp.eq.s32.totalorder %s27, 0
      %p109 = por %p107, %p108
      %p110 = scmp.ne.s32.totalorder %s98, %s99
      %p111 = scmp.eq.s32.totalorder %s28, 1
      %p112 = por %p110, %p111
      %p114 = scmp.ne.s32.totalorder %s99, %s113
      %p115 = scmp.eq.s32.totalorder %s28, 0
      %p116 = por %p114, %p115
      %s118 = sadd.s32 %s117, 1
      %p121 = scmp.eq.s32.totalorder %s22, 1
      %p122 = scmp.ne.s32.totalorder %s117, %s119
      %p123 = scmp.eq.s32.totalorder %s22, 0
      %p124 = por %p122, %p123
      %p125 = scmp.ne.s32.totalorder %s117, %s119
      %p126 = scmp.eq.s32.totalorder %s27, 1
      %p127 = por %p125, %p126
      %p128 = scmp.ne.s32.totalorder %s119, %s120
      %p129 = scmp.eq.s32.totalorder %s27, 0
      %p130 = por %p128, %p129
      %p131 = scmp.ne.s32.totalorder %s119, %s120
      %p132 = scmp.eq.s32.totalorder %s28, 1
      %p133 = por %p131, %p132
      %p135 = scmp.ne.s32.totalorder %s120, %s134
      %p136 = scmp.eq.s32.totalorder %s28, 0
      %p137 = por %p135, %p136
      %s139 = sadd.s32 %s138, 1
      %p142 = scmp.eq.s32.totalorder %s22, 1
      %p143 = scmp.ne.s32.totalorder %s138, %s140
      %p144 = scmp.eq.s32.totalorder %s22, 0
      %p145 = por %p143, %p144
      %p146 = scmp.ne.s32.totalorder %s138, %s140
      %p147 = scmp.eq.s32.totalorder %s27, 1
      %p148 = por %p146, %p147
      %p149 = scmp.ne.s32.totalorder %s140, %s141
      %p150 = scmp.eq.s32.totalorder %s27, 0
      %p151 = por %p149, %p150
      %p152 = scmp.ne.s32.totalorder %s140, %s141
      %p153 = scmp.eq.s32.totalorder %s28, 1
      %p154 = por %p152, %p153
      %p156 = scmp.ne.s32.totalorder %s141, %s155
      %p157 = scmp.eq.s32.totalorder %s28, 0
      %p158 = por %p156, %p157
      %s160 = sadd.s32 %s159, 1
      %p163 = scmp.eq.s32.totalorder %s22, 1
      %p164 = scmp.ne.s32.totalorder %s159, %s161
      %p165 = scmp.eq.s32.totalorder %s22, 0
      %p166 = por %p164, %p165
      %p167 = scmp.ne.s32.totalorder %s159, %s161
      %p168 = scmp.eq.s32.totalorder %s27, 1
      %p169 = por %p167, %p168
      %p170 = scmp.ne.s32.totalorder %s161, %s162
      %p171 = scmp.eq.s32.totalorder %s27, 0
      %p172 = por %p170, %p171
      %p173 = scmp.ne.s32.totalorder %s161, %s162
      %p174 = scmp.eq.s32.totalorder %s28, 1
      %p175 = por %p173, %p174
      %p177 = scmp.ne.s32.totalorder %s162, %s176
      %p178 = scmp.eq.s32.totalorder %s28, 0
      %p179 = por %p177, %p178
      %s180 = ssub.s32 %s29, %s41
      %s181 = ssub.s32 %s30, %s37
      %s182 = sor.u32 %s180, %s181
      %p183 = scmp.eq.s32.totalorder %s182, 0
      %s185 = sadd.s32 %s184, 1
      %s186 = scalar_select %p183, %s184, %s185
      %p189 = pneg %p183
      %p190 = scmp.eq.s32.totalorder %s22, 1
      %p191 = por %p189, %p190
      %p192 = scmp.ne.s32.totalorder %s184, %s187
      %p193 = scmp.eq.s32.totalorder %s22, 0
      %p194 = por %p192, %p193
      %p195 = scmp.ne.s32.totalorder %s184, %s187
      %p196 = scmp.eq.s32.totalorder %s27, 1
      %p197 = por %p195, %p196
      %p198 = scmp.ne.s32.totalorder %s187, %s188
      %p199 = scmp.eq.s32.totalorder %s27, 0
      %p200 = por %p198, %p199
      %p201 = scmp.ne.s32.totalorder %s187, %s188
      %p202 = scmp.eq.s32.totalorder %s28, 1
      %p203 = por %p201, %p202
      %p205 = scmp.ne.s32.totalorder %s188, %s204
      %p206 = scmp.eq.s32.totalorder %s28, 0
      %p207 = por %p205, %p206
      %p208 = scmp.le.s32.totalorder 1, %s22
      %p209 = scmp.lt.s32.totalorder %s22, 3
      %p210 = pnand %p208, %p209
      %p211 = pneg %p210
      // Predicated region
      $region9: #{tpu_custom_call.1} parent=5 // pred_check
        _
      $region10: #{tpu_custom_call.1} parent=5 // pred_check_branch
        %213 = sbr.rel (%p210) target = $region12
      $region11: #{tpu_custom_call.1} parent=5 // pred_region
        %s214 = ssub.s32 %s22, 1
        // Predicated region
        $region13: #{tpu_custom_call.1} parent=11 // pred_check
          %p215 = pneg %p109
        $region14: #{tpu_custom_call.1} parent=11 // pred_check_branch
          %217 = sbr.rel (%p215) target = $region16
        $region15: #{tpu_custom_call.1} parent=11 // pred_region
          %s219 = ssub.s32 1024, 1024
          %220 = vsyncadd [#allocation7], %s219
          %s221 = sshll.u32 [#allocation8], 4
          %s222 = int_to_ptr.vmem [resolvable:$true] %s221
          %227 = dma.hbm_to_vmem [thread:$0]  %s2, 1024, %s222, [#allocation7], 128, 128, 8
        $region16: #{tpu_custom_call.1} parent=11 // pred_fallthru
          _
        // Predicated region
        $region17: #{tpu_custom_call.1} parent=11 // pred_check
          %p228 = pneg %p130
        $region18: #{tpu_custom_call.1} parent=11 // pred_check_branch
          %230 = sbr.rel (%p228) target = $region20
        $region19: #{tpu_custom_call.1} parent=11 // pred_region
          _
        $region20: #{tpu_custom_call.1} parent=11 // pred_fallthru
          _
        // Predicated region
        $region21: #{tpu_custom_call.1} parent=11 // pred_check
          %p231 = pneg %p151
        $region22: #{tpu_custom_call.1} parent=11 // pred_check_branch
          %233 = sbr.rel (%p231) target = $region24
        $region23: #{tpu_custom_call.1} parent=11 // pred_region
          %s235 = ssub.s32 1024, 1024
          %236 = vsyncadd [#allocation10], %s235
          %s237 = sshll.u32 [#allocation9], 4
          %s238 = int_to_ptr.vmem [resolvable:$true] %s237
          %243 = dma.hbm_to_vmem [thread:$0]  %s4, 1024, %s238, [#allocation10], 128, 128, 8
        $region24: #{tpu_custom_call.1} parent=11 // pred_fallthru
          _
        // Predicated region
        $region25: #{tpu_custom_call.1} parent=11 // pred_check
          %p244 = pneg %p172
        $region26: #{tpu_custom_call.1} parent=11 // pred_check_branch
          %246 = sbr.rel (%p244) target = $region28
        $region27: #{tpu_custom_call.1} parent=11 // pred_region
          _
        $region28: #{tpu_custom_call.1} parent=11 // pred_fallthru
          _
      $region12: #{tpu_custom_call.1} parent=5 // pred_fallthru
        _
      %p247 = scmp.lt.s32.totalorder %s22, 2
      // Predicated region
      $region29: #{tpu_custom_call.1} parent=5 // pred_check
        %p248 = pneg %p247
      $region30: #{tpu_custom_call.1} parent=5 // pred_check_branch
        %250 = sbr.rel (%p248) target = $region32
      $region31: #{tpu_custom_call.1} parent=5 // pred_region
        // Predicated region
        $region33: #{tpu_custom_call.1} parent=31 // pred_check
          %p251 = pneg %p56
        $region34: #{tpu_custom_call.1} parent=31 // pred_check_branch
          %253 = sbr.rel (%p251) target = $region36
        $region35: #{tpu_custom_call.1} parent=31 // pred_region
          %s254 = sand.u32 %s46, 1
          %s255 = scalar_lea.sflag [#allocation4], %s254
          %s256 = sand.u32 %s46, 1
          %s257 = smul.addr %s256, 8
          %s258 = scalar_lea.vmem [#allocation3], %s257
          %s260 = ssub.s32 128, 128
          %261 = vsyncadd %s255, %s260
          %s262 = sadd.s32 %s30, %s29
          %s263 = smul.addr %s262, 128
          %s264 = scalar_lea.hbm %s0, %s263
          %s266 = sshll.u32 %s258, 4
          %s267 = int_to_ptr.vmem [resolvable:$true] %s266
          %269 = dma.hbm_to_vmem [thread:$0]  %s264, 128, %s267, %s255
        $region36: #{tpu_custom_call.1} parent=31 // pred_fallthru
          _
        // Predicated region
        $region37: #{tpu_custom_call.1} parent=31 // pred_check
          %p270 = pneg %p82
        $region38: #{tpu_custom_call.1} parent=31 // pred_check_branch
          %272 = sbr.rel (%p270) target = $region40
        $region39: #{tpu_custom_call.1} parent=31 // pred_region
          %s273 = sand.u32 %s22, 1
          %s274 = scalar_lea.sflag [#allocation7], %s273
          %s275 = sand.u32 %s72, 1
          %s276 = smul.addr %s275, 16
          %s277 = scalar_lea.vmem [#allocation6], %s276
          %s279 = ssub.s32 256, 256
          %280 = vsyncadd %s274, %s279
          %s281 = smul.addr %s29, 2
          %s282 = smul.addr %s281, 128
          %s283 = scalar_lea.hbm %s1, %s282
          %s284 = sshll.u32 %s277, 4
          %s285 = int_to_ptr.vmem [resolvable:$true] %s284
          %290 = dma.hbm_to_vmem [thread:$0]  %s283, 256, %s285, %s274, 128, 128, 8
        $region40: #{tpu_custom_call.1} parent=31 // pred_fallthru
          _
      $region32: #{tpu_custom_call.1} parent=5 // pred_fallthru
        _
      %p291 = scmp.le.s32.totalorder 1, %s22
      %p292 = scmp.lt.s32.totalorder %s22, 3
      %p293 = pnand %p291, %p292
      %p294 = pneg %p293
      // Predicated region
      $region41: #{tpu_custom_call.1} parent=5 // pred_check
        _
      $region42: #{tpu_custom_call.1} parent=5 // pred_check_branch
        %296 = sbr.rel (%p293) target = $region44
      $region43: #{tpu_custom_call.1} parent=5 // pred_region
        %s297 = ssub.s32 %s22, 1
        %s298 = sand.u32 %s49, 1
        %s299 = scalar_lea.sflag [#allocation4], %s298
        %s300 = sand.u32 %s49, 1
        %s301 = smul.addr %s300, 8
        %s302 = scalar_lea.vmem [#allocation3], %s301
        // Predicated region
        $region45: #{tpu_custom_call.1} parent=43 // pred_check
          %p303 = pneg %p62
        $region46: #{tpu_custom_call.1} parent=43 // pred_check_branch
          %305 = sbr.rel (%p303) target = $region48
        $region47: #{tpu_custom_call.1} parent=43 // pred_region
          %306 = dma.done %s299, 128
        $region48: #{tpu_custom_call.1} parent=43 // pred_fallthru
          _
        %s307 = sand.u32 %s27, 1
        %s308 = scalar_lea.sflag [#allocation7], %s307
        %s309 = sand.u32 %s75, 1
        %s310 = smul.addr %s309, 16
        %s311 = scalar_lea.vmem [#allocation6], %s310
        // Predicated region
        $region49: #{tpu_custom_call.1} parent=43 // pred_check
          %p312 = pneg %p88
        $region50: #{tpu_custom_call.1} parent=43 // pred_check_branch
          %314 = sbr.rel (%p312) target = $region52
        $region51: #{tpu_custom_call.1} parent=43 // pred_region
          %315 = dma.done %s308, 256
        $region52: #{tpu_custom_call.1} parent=43 // pred_fallthru
          _
        // Predicated region
        $region53: #{tpu_custom_call.1} parent=43 // pred_check
          %p316 = pneg %p109
        $region54: #{tpu_custom_call.1} parent=43 // pred_check_branch
          %318 = sbr.rel (%p316) target = $region56
        $region55: #{tpu_custom_call.1} parent=43 // pred_region
          %319 = dma.done [#allocation7], 1024
        $region56: #{tpu_custom_call.1} parent=43 // pred_fallthru
          _
        // Predicated region
        $region57: #{tpu_custom_call.1} parent=43 // pred_check
          %p320 = pneg %p151
        $region58: #{tpu_custom_call.1} parent=43 // pred_check_branch
          %322 = sbr.rel (%p320) target = $region60
        $region59: #{tpu_custom_call.1} parent=43 // pred_region
          %323 = dma.done [#allocation10], 1024
        $region60: #{tpu_custom_call.1} parent=43 // pred_fallthru
          _
        %s324 = sand.u32 %s49, 1
        %s325 = scalar_lea.sflag [#allocation4], %s324
        %s326 = sand.u32 %s49, 1
        %s327 = smul.addr %s326, 8
        %s328 = scalar_lea.vmem [#allocation3], %s327
        %p329 = pneg %p62
        %p330 = pneg %p59
        %s331 = sand.u32 %s27, 1
        %s332 = scalar_lea.sflag [#allocation7], %s331
        %s333 = sand.u32 %s75, 1
        %s334 = smul.addr %s333, 16
        %s335 = scalar_lea.vmem [#allocation6], %s334
        %p336 = pneg %p88
        %p337 = pneg %p85
        %p338 = pneg %p109
        %p339 = pneg %p106
        %p340 = pneg %p130
        %p341 = pneg %p127
        %p342 = pneg %p151
        %p343 = pneg %p148
        %p344 = pneg %p172
        %p345 = pneg %p169
        %p346 = pneg %p200
        %p347 = pneg %p197
        %s348 = sand.u32 %s187, 1
        %s349 = scalar_lea.sflag [#allocation5], %s348
        %s350 = sand.u32 %s187, 1
        %s351 = smul.addr %s350, 32
        %s352 = scalar_lea.vmem [#allocation11], %s351
        %p353 = scmp.eq.s32.totalorder %s32, 0
        // Predicated region
        $region61: #{tpu_custom_call.1} parent=43 // pred_check
          %p354 = pneg %p353
        $region62: #{tpu_custom_call.1} parent=43 // pred_check_branch
          %356 = sbr.rel (%p354) target = $region64
        $region63: #{tpu_custom_call.1} parent=43 // pred_region
          %v357 = vld [vmem:[%s311] ss:$4 sm:$0xf]
          %s358 = scalar_lea.vmem %s311, 1 [#allocation6]
          %v359 = vld [vmem:[%s358] ss:$4 sm:$0xf]
          %v360 = vadd.f32 %v357, %v359
          %s361 = scalar_lea.vmem %s311, 2 [#allocation6]
          %v362 = vld [vmem:[%s361] ss:$4 sm:$0xf]
          %v363 = vadd.f32 %v360, %v362
          %s364 = scalar_lea.vmem %s311, 3 [#allocation6]
          %v365 = vld [vmem:[%s364] ss:$4 sm:$0xf]
          %v366 = vadd.f32 %v363, %v365
          %v367 = vmul.f32 %v366, 0.25
          %v368 = vld [vmem:[#allocation9] sm:$0xff]
          %v369 = vld [vmem:[#allocation9 + $0x8] sm:$0xff]
          %v370 = vld [vmem:[#allocation9 + $0x10] sm:$0xff]
          %v371 = vld [vmem:[#allocation9 + $0x18] sm:$0xff]
          %v372 = vld [vmem:[%s5] sm:$0x1]
          %v374 = vlaneseq
          %v375 = vshrl.u32 %v374, 7
          %v376 = vsub.s32 0, %v375
          %v377 = vrot.slane %v372, %v376
          %vm379 = vcmask 261120
          %v381 = vsel %vm379, %v367, 0
          %383 = vmatprep.subr.mxu0 0.0
          %384 = vmatpush1.msra.mxu0 %v368
          %385 = vmatprep.subr.mxu0 0.0
          %386 = vmatpush1.msra.mxu0 %v369
          %387 = vmatprep.subr.mxu0 0.0
          %388 = vmatpush1.msra.mxu0 %v370
          %389 = vmatprep.subr.mxu0 0.0
          %390 = vmatpush1.msra.mxu0 %v371
          %391 = vmatprep.subr.mxu0 0.0
          %392 = vmatpush1.msra.mxu0 0.0
          %393 = vmatprep.subr.mxu0 0.0
          %394 = vmatpush1.msra.mxu0 0.0
          %395 = vmatprep.subr.mxu0 0.0
          %396 = vmatpush1.msra.mxu0 0.0
          %397 = vmatprep.subr.mxu0 0.0
          %398 = vmatpush1.msra.mxu0 0.0
          %399 = vmatprep.subr.mxu0 0.0
          %400 = vmatpush1.msra.mxu0 0.0
          %401 = vmatprep.subr.mxu0 0.0
          %402 = vmatpush1.msra.mxu0 0.0
          %403 = vmatprep.subr.mxu0 0.0
          %404 = vmatpush1.msra.mxu0 0.0
          %405 = vmatprep.subr.mxu0 0.0
          %406 = vmatpush1.msra.mxu0 0.0
          %407 = vmatprep.subr.mxu0 0.0
          %408 = vmatpush1.msra.mxu0 0.0
          %409 = vmatprep.subr.mxu0 0.0
          %410 = vmatpush1.msra.mxu0 0.0
          %411 = vmatprep.subr.mxu0 0.0
          %412 = vmatpush1.msra.mxu0 0.0
          %413 = vmatprep.subr.mxu0 0.0
          %414 = vmatpush1.msra.mxu0 0.0
          %415 = vmatprep.subr.mxu0 0.0
          %416 = vmatpush1.msra.mxu0 0.0
          %417 = vmatprep.subr.mxu0 0.0
          %418 = vmatpush1.msra.mxu0 0.0
          %419 = vmatprep.subr.mxu0 0.0
          %420 = vmatpush1.msra.mxu0 0.0
          %421 = vmatprep.subr.mxu0 0.0
          %422 = vmatpush1.msra.mxu0 0.0
          %423 = vmatprep.subr.mxu0 0.0
          %424 = vmatpush1.msra.mxu0 0.0
          %425 = vmatprep.subr.mxu0 0.0
          %426 = vmatpush1.msra.mxu0 0.0
          %427 = vmatprep.subr.mxu0 0.0
          %428 = vmatpush1.msra.mxu0 0.0
          %429 = vmatprep.subr.mxu0 0.0
          %430 = vmatpush1.msra.mxu0 0.0
          %431 = vmatprep.subr.mxu0 0.0
          %432 = vmatpush1.msra.mxu0 0.0
          %433 = vmatprep.subr.mxu0 0.0
          %434 = vmatpush1.msra.mxu0 0.0
          %435 = vmatprep.subr.mxu0 0.0
          %436 = vmatpush1.msra.mxu0 0.0
          %437 = vmatprep.subr.mxu0 0.0
          %438 = vmatpush1.msra.mxu0 0.0
          %439 = vmatprep.subr.mxu0 0.0
          %440 = vmatpush1.msra.mxu0 0.0
          %441 = vmatprep.subr.mxu0 0.0
          %442 = vmatpush1.msra.mxu0 0.0
          %443 = vmatprep.subr.mxu0 0.0
          %444 = vmatpush1.msra.mxu0 0.0
          %445 = vmatprep.subr.mxu0 0.0
          %446 = vmatpush1.msra.mxu0 0.0
          %447 = vmatprep.mubr.f32.mxu0 0.0
          %448 = vmatmul.mubr.f32.gmra.mrb[0].mxu0 %v381
          %v449 = vpop.f32.mrb[0].mxu0
          %v450 = vadd.f32 %v377, %v449
          %v451 = vpop.f32.mrb[0].mxu0
          %452 = vdwg.mxu0
          %v453 = vmax.f32 %v450, 0.0
          %s454 = scalar_lea.vmem [#allocation9], 32
          %v455 = vld [vmem:[%s454] sm:$0xff]
          %v456 = vld [vmem:[%s454 + $0x8] sm:$0xff]
          %v457 = vld [vmem:[%s454 + $0x10] sm:$0xff]
          %v458 = vld [vmem:[%s454 + $0x18] sm:$0xff]
          %s459 = scalar_lea.vmem %s5, 1
          %v460 = vld [vmem:[%s459] sm:$0x1]
          %v462 = vlaneseq
          %v463 = vshrl.u32 %v462, 7
          %v464 = vsub.s32 0, %v463
          %v465 = vrot.slane %v460, %v464
          %v468 = vsel %vm379, %v453, 0
          %470 = vmatprep.subr.mxu0 0.0
          %471 = vmatpush1.msra.mxu0 %v455
          %472 = vmatprep.subr.mxu0 0.0
          %473 = vmatpush1.msra.mxu0 %v456
          %474 = vmatprep.subr.mxu0 0.0
          %475 = vmatpush1.msra.mxu0 %v457
          %476 = vmatprep.subr.mxu0 0.0
          %477 = vmatpush1.msra.mxu0 %v458
          %478 = vmatprep.subr.mxu0 0.0
          %479 = vmatpush1.msra.mxu0 0.0
          %480 = vmatprep.subr.mxu0 0.0
          %481 = vmatpush1.msra.mxu0 0.0
          %482 = vmatprep.subr.mxu0 0.0
          %483 = vmatpush1.msra.mxu0 0.0
          %484 = vmatprep.subr.mxu0 0.0
          %485 = vmatpush1.msra.mxu0 0.0
          %486 = vmatprep.subr.mxu0 0.0
          %487 = vmatpush1.msra.mxu0 0.0
          %488 = vmatprep.subr.mxu0 0.0
          %489 = vmatpush1.msra.mxu0 0.0
          %490 = vmatprep.subr.mxu0 0.0
          %491 = vmatpush1.msra.mxu0 0.0
          %492 = vmatprep.subr.mxu0 0.0
          %493 = vmatpush1.msra.mxu0 0.0
          %494 = vmatprep.subr.mxu0 0.0
          %495 = vmatpush1.msra.mxu0 0.0
          %496 = vmatprep.subr.mxu0 0.0
          %497 = vmatpush1.msra.mxu0 0.0
          %498 = vmatprep.subr.mxu0 0.0
          %499 = vmatpush1.msra.mxu0 0.0
          %500 = vmatprep.subr.mxu0 0.0
          %501 = vmatpush1.msra.mxu0 0.0
          %502 = vmatprep.subr.mxu0 0.0
          %503 = vmatpush1.msra.mxu0 0.0
          %504 = vmatprep.subr.mxu0 0.0
          %505 = vmatpush1.msra.mxu0 0.0
          %506 = vmatprep.subr.mxu0 0.0
          %507 = vmatpush1.msra.mxu0 0.0
          %508 = vmatprep.subr.mxu0 0.0
          %509 = vmatpush1.msra.mxu0 0.0
          %510 = vmatprep.subr.mxu0 0.0
          %511 = vmatpush1.msra.mxu0 0.0
          %512 = vmatprep.subr.mxu0 0.0
          %513 = vmatpush1.msra.mxu0 0.0
          %514 = vmatprep.subr.mxu0 0.0
          %515 = vmatpush1.msra.mxu0 0.0
          %516 = vmatprep.subr.mxu0 0.0
          %517 = vmatpush1.msra.mxu0 0.0
          %518 = vmatprep.subr.mxu0 0.0
          %519 = vmatpush1.msra.mxu0 0.0
          %520 = vmatprep.subr.mxu0 0.0
          %521 = vmatpush1.msra.mxu0 0.0
          %522 = vmatprep.subr.mxu0 0.0
          %523 = vmatpush1.msra.mxu0 0.0
          %524 = vmatprep.subr.mxu0 0.0
          %525 = vmatpush1.msra.mxu0 0.0
          %526 = vmatprep.subr.mxu0 0.0
          %527 = vmatpush1.msra.mxu0 0.0
          %528 = vmatprep.subr.mxu0 0.0
          %529 = vmatpush1.msra.mxu0 0.0
          %530 = vmatprep.subr.mxu0 0.0
          %531 = vmatpush1.msra.mxu0 0.0
          %532 = vmatprep.subr.mxu0 0.0
          %533 = vmatpush1.msra.mxu0 0.0
          %534 = vmatprep.mubr.f32.mxu0 0.0
          %535 = vmatmul.mubr.f32.gmra.mrb[0].mxu0 %v468
          %v536 = vpop.f32.mrb[0].mxu0
          %v537 = vadd.f32 %v465, %v536
          %v538 = vpop.f32.mrb[0].mxu0
          %539 = vdwg.mxu0
          %v540 = vmax.f32 %v537, 0.0
          %vm541 = vcmask 1043456
          %v542 = vsel %vm541, %v540, 0.0
          %543 = vxpose.xlu0.b32.start [1/16] %v542, 128
          %544 = vxpose.xlu0.b32.cont [2/16] 0.0, 128
          %545 = vxpose.xlu0.b32.cont [3/16] 0.0, 128
          %546 = vxpose.xlu0.b32.cont [4/16] 0.0, 128
          %547 = vxpose.xlu0.b32.cont [5/16] 0.0, 128
          %548 = vxpose.xlu0.b32.cont [6/16] 0.0, 128
          %549 = vxpose.xlu0.b32.cont [7/16] 0.0, 128
          %550 = vxpose.xlu0.b32.cont [8/16] 0.0, 128
          %551 = vxpose.xlu0.b32.cont [9/16] 0.0, 128
          %552 = vxpose.xlu0.b32.cont [10/16] 0.0, 128
          %553 = vxpose.xlu0.b32.cont [11/16] 0.0, 128
          %554 = vxpose.xlu0.b32.cont [12/16] 0.0, 128
          %555 = vxpose.xlu0.b32.cont [13/16] 0.0, 128
          %556 = vxpose.xlu0.b32.cont [14/16] 0.0, 128
          %557 = vxpose.xlu0.b32.cont [15/16] 0.0, 128
          %558 = vxpose.xlu0.b32.end [16/16] 0.0, 128
          %v559 = vpop.trf.xlu0
          %v560 = vpop.trf.xlu0
          %v561 = vpop.trf.xlu0
          %v562 = vpop.trf.xlu0
          %v563 = vpop.trf.xlu0
          %v564 = vpop.trf.xlu0
          %v565 = vpop.trf.xlu0
          %v566 = vpop.trf.xlu0
          %v567 = vpop.trf.xlu0
          %v568 = vpop.trf.xlu0
          %v569 = vpop.trf.xlu0
          %v570 = vpop.trf.xlu0
          %v571 = vpop.trf.xlu0
          %v572 = vpop.trf.xlu0
          %v573 = vpop.trf.xlu0
          %v574 = vpop.trf.xlu0
          %575 = vst [vmem:[#allocation2] sm:$0xff] %v559
          %576 = vst [vmem:[#allocation2 + $0x8] sm:$0xff] %v560
          %577 = vst [vmem:[#allocation2 + $0x10] sm:$0xff] %v561
          %578 = vst [vmem:[#allocation2 + $0x18] sm:$0xff] %v562
        $region64: #{tpu_custom_call.1} parent=43 // pred_fallthru
          _
        %v579 = vld [vmem:[%s302] sm:$0xff]
        %v580 = vld [vmem:[#allocation8] sm:$0xff]
        %v581 = vld [vmem:[#allocation8 + $0x8] sm:$0xff]
        %v582 = vld [vmem:[#allocation8 + $0x10] sm:$0xff]
        %v583 = vld [vmem:[#allocation8 + $0x18] sm:$0xff]
        %v584 = vld [vmem:[%s3] sm:$0x1]
        %v586 = vlaneseq
        %v587 = vshrl.u32 %v586, 7
        %v588 = vsub.s32 0, %v587
        %v589 = vrot.slane %v584, %v588
        %vm591 = vcmask 261120
        %v593 = vsel %vm591, %v579, 0
        %595 = vmatprep.subr.mxu0 0.0
        %596 = vmatpush1.msra.mxu0 %v580
        %597 = vmatprep.subr.mxu0 0.0
        %598 = vmatpush1.msra.mxu0 %v581
        %599 = vmatprep.subr.mxu0 0.0
        %600 = vmatpush1.msra.mxu0 %v582
        %601 = vmatprep.subr.mxu0 0.0
        %602 = vmatpush1.msra.mxu0 %v583
        %603 = vmatprep.subr.mxu0 0.0
        %604 = vmatpush1.msra.mxu0 0.0
        %605 = vmatprep.subr.mxu0 0.0
        %606 = vmatpush1.msra.mxu0 0.0
        %607 = vmatprep.subr.mxu0 0.0
        %608 = vmatpush1.msra.mxu0 0.0
        %609 = vmatprep.subr.mxu0 0.0
        %610 = vmatpush1.msra.mxu0 0.0
        %611 = vmatprep.subr.mxu0 0.0
        %612 = vmatpush1.msra.mxu0 0.0
        %613 = vmatprep.subr.mxu0 0.0
        %614 = vmatpush1.msra.mxu0 0.0
        %615 = vmatprep.subr.mxu0 0.0
        %616 = vmatpush1.msra.mxu0 0.0
        %617 = vmatprep.subr.mxu0 0.0
        %618 = vmatpush1.msra.mxu0 0.0
        %619 = vmatprep.subr.mxu0 0.0
        %620 = vmatpush1.msra.mxu0 0.0
        %621 = vmatprep.subr.mxu0 0.0
        %622 = vmatpush1.msra.mxu0 0.0
        %623 = vmatprep.subr.mxu0 0.0
        %624 = vmatpush1.msra.mxu0 0.0
        %625 = vmatprep.subr.mxu0 0.0
        %626 = vmatpush1.msra.mxu0 0.0
        %627 = vmatprep.subr.mxu0 0.0
        %628 = vmatpush1.msra.mxu0 0.0
        %629 = vmatprep.subr.mxu0 0.0
        %630 = vmatpush1.msra.mxu0 0.0
        %631 = vmatprep.subr.mxu0 0.0
        %632 = vmatpush1.msra.mxu0 0.0
        %633 = vmatprep.subr.mxu0 0.0
        %634 = vmatpush1.msra.mxu0 0.0
        %635 = vmatprep.subr.mxu0 0.0
        %636 = vmatpush1.msra.mxu0 0.0
        %637 = vmatprep.subr.mxu0 0.0
        %638 = vmatpush1.msra.mxu0 0.0
        %639 = vmatprep.subr.mxu0 0.0
        %640 = vmatpush1.msra.mxu0 0.0
        %641 = vmatprep.subr.mxu0 0.0
        %642 = vmatpush1.msra.mxu0 0.0
        %643 = vmatprep.subr.mxu0 0.0
        %644 = vmatpush1.msra.mxu0 0.0
        %645 = vmatprep.subr.mxu0 0.0
        %646 = vmatpush1.msra.mxu0 0.0
        %647 = vmatprep.subr.mxu0 0.0
        %648 = vmatpush1.msra.mxu0 0.0
        %649 = vmatprep.subr.mxu0 0.0
        %650 = vmatpush1.msra.mxu0 0.0
        %651 = vmatprep.subr.mxu0 0.0
        %652 = vmatpush1.msra.mxu0 0.0
        %653 = vmatprep.subr.mxu0 0.0
        %654 = vmatpush1.msra.mxu0 0.0
        %655 = vmatprep.subr.mxu0 0.0
        %656 = vmatpush1.msra.mxu0 0.0
        %657 = vmatprep.subr.mxu0 0.0
        %658 = vmatpush1.msra.mxu0 0.0
        %659 = vmatprep.mubr.f32.mxu0 0.0
        %660 = vmatmul.mubr.f32.gmra.mrb[0].mxu0 %v593
        %v661 = vpop.f32.mrb[0].mxu0
        %v662 = vadd.f32 %v589, %v661
        %v663 = vpop.f32.mrb[0].mxu0
        %664 = vdwg.mxu0
        %v665 = vmax.f32 %v662, 0.0
        %s666 = scalar_lea.vmem [#allocation8], 32
        %v667 = vld [vmem:[%s666] sm:$0xff]
        %v668 = vld [vmem:[%s666 + $0x8] sm:$0xff]
        %v669 = vld [vmem:[%s666 + $0x10] sm:$0xff]
        %v670 = vld [vmem:[%s666 + $0x18] sm:$0xff]
        %s671 = scalar_lea.vmem %s3, 1
        %v672 = vld [vmem:[%s671] sm:$0x1]
        %v674 = vlaneseq
        %v675 = vshrl.u32 %v674, 7
        %v676 = vsub.s32 0, %v675
        %v677 = vrot.slane %v672, %v676
        %v680 = vsel %vm591, %v665, 0
        %682 = vmatprep.subr.mxu0 0.0
        %683 = vmatpush1.msra.mxu0 %v667
        %684 = vmatprep.subr.mxu0 0.0
        %685 = vmatpush1.msra.mxu0 %v668
        %686 = vmatprep.subr.mxu0 0.0
        %687 = vmatpush1.msra.mxu0 %v669
        %688 = vmatprep.subr.mxu0 0.0
        %689 = vmatpush1.msra.mxu0 %v670
        %690 = vmatprep.subr.mxu0 0.0
        %691 = vmatpush1.msra.mxu0 0.0
        %692 = vmatprep.subr.mxu0 0.0
        %693 = vmatpush1.msra.mxu0 0.0
        %694 = vmatprep.subr.mxu0 0.0
        %695 = vmatpush1.msra.mxu0 0.0
        %696 = vmatprep.subr.mxu0 0.0
        %697 = vmatpush1.msra.mxu0 0.0
        %698 = vmatprep.subr.mxu0 0.0
        %699 = vmatpush1.msra.mxu0 0.0
        %700 = vmatprep.subr.mxu0 0.0
        %701 = vmatpush1.msra.mxu0 0.0
        %702 = vmatprep.subr.mxu0 0.0
        %703 = vmatpush1.msra.mxu0 0.0
        %704 = vmatprep.subr.mxu0 0.0
        %705 = vmatpush1.msra.mxu0 0.0
        %706 = vmatprep.subr.mxu0 0.0
        %707 = vmatpush1.msra.mxu0 0.0
        %708 = vmatprep.subr.mxu0 0.0
        %709 = vmatpush1.msra.mxu0 0.0
        %710 = vmatprep.subr.mxu0 0.0
        %711 = vmatpush1.msra.mxu0 0.0
        %712 = vmatprep.subr.mxu0 0.0
        %713 = vmatpush1.msra.mxu0 0.0
        %714 = vmatprep.subr.mxu0 0.0
        %715 = vmatpush1.msra.mxu0 0.0
        %716 = vmatprep.subr.mxu0 0.0
        %717 = vmatpush1.msra.mxu0 0.0
        %718 = vmatprep.subr.mxu0 0.0
        %719 = vmatpush1.msra.mxu0 0.0
        %720 = vmatprep.subr.mxu0 0.0
        %721 = vmatpush1.msra.mxu0 0.0
        %722 = vmatprep.subr.mxu0 0.0
        %723 = vmatpush1.msra.mxu0 0.0
        %724 = vmatprep.subr.mxu0 0.0
        %725 = vmatpush1.msra.mxu0 0.0
        %726 = vmatprep.subr.mxu0 0.0
        %727 = vmatpush1.msra.mxu0 0.0
        %728 = vmatprep.subr.mxu0 0.0
        %729 = vmatpush1.msra.mxu0 0.0
        %730 = vmatprep.subr.mxu0 0.0
        %731 = vmatpush1.msra.mxu0 0.0
        %732 = vmatprep.subr.mxu0 0.0
        %733 = vmatpush1.msra.mxu0 0.0
        %734 = vmatprep.subr.mxu0 0.0
        %735 = vmatpush1.msra.mxu0 0.0
        %736 = vmatprep.subr.mxu0 0.0
        %737 = vmatpush1.msra.mxu0 0.0
        %738 = vmatprep.subr.mxu0 0.0
        %739 = vmatpush1.msra.mxu0 0.0
        %740 = vmatprep.subr.mxu0 0.0
        %741 = vmatpush1.msra.mxu0 0.0
        %742 = vmatprep.subr.mxu0 0.0
        %743 = vmatpush1.msra.mxu0 0.0
        %744 = vmatprep.subr.mxu0 0.0
        %745 = vmatpush1.msra.mxu0 0.0
        %746 = vmatprep.mubr.f32.mxu0 0.0
        %747 = vmatmul.mubr.f32.gmra.mrb[0].mxu0 %v680
        %v748 = vpop.f32.mrb[0].mxu0
        %v749 = vadd.f32 %v677, %v748
        %v750 = vpop.f32.mrb[0].mxu0
        %751 = vdwg.mxu0
        %v752 = vmax.f32 %v749, 0.0
        %v753 = vld [vmem:[#allocation2] sm:$0xff]
        %vm754 = vcmask 64512
        %v756 = vsel %vm754, %v752, 0
        %758 = vmatprep.subr.mxu0 0.0
        %759 = vmatpush1.msra.mxu0 %v753
        %760 = vmatprep.subr.mxu0 0.0
        %761 = vmatpush1.msra.mxu0 0.0
        %762 = vmatprep.subr.mxu0 0.0
        %763 = vmatpush1.msra.mxu0 0.0
        %764 = vmatprep.subr.mxu0 0.0
        %765 = vmatpush1.msra.mxu0 0.0
        %766 = vmatprep.subr.mxu0 0.0
        %767 = vmatpush1.msra.mxu0 0.0
        %768 = vmatprep.subr.mxu0 0.0
        %769 = vmatpush1.msra.mxu0 0.0
        %770 = vmatprep.subr.mxu0 0.0
        %771 = vmatpush1.msra.mxu0 0.0
        %772 = vmatprep.subr.mxu0 0.0
        %773 = vmatpush1.msra.mxu0 0.0
        %774 = vmatprep.subr.mxu0 0.0
        %775 = vmatpush1.msra.mxu0 0.0
        %776 = vmatprep.subr.mxu0 0.0
        %777 = vmatpush1.msra.mxu0 0.0
        %778 = vmatprep.subr.mxu0 0.0
        %779 = vmatpush1.msra.mxu0 0.0
        %780 = vmatprep.subr.mxu0 0.0
        %781 = vmatpush1.msra.mxu0 0.0
        %782 = vmatprep.subr.mxu0 0.0
        %783 = vmatpush1.msra.mxu0 0.0
        %784 = vmatprep.subr.mxu0 0.0
        %785 = vmatpush1.msra.mxu0 0.0
        %786 = vmatprep.subr.mxu0 0.0
        %787 = vmatpush1.msra.mxu0 0.0
        %788 = vmatprep.subr.mxu0 0.0
        %789 = vmatpush1.msra.mxu0 0.0
        %790 = vmatprep.subr.mxu0 0.0
        %791 = vmatpush1.msra.mxu0 0.0
        %792 = vmatprep.subr.mxu0 0.0
        %793 = vmatpush1.msra.mxu0 0.0
        %794 = vmatprep.subr.mxu0 0.0
        %795 = vmatpush1.msra.mxu0 0.0
        %796 = vmatprep.subr.mxu0 0.0
        %797 = vmatpush1.msra.mxu0 0.0
        %798 = vmatprep.subr.mxu0 0.0
        %799 = vmatpush1.msra.mxu0 0.0
        %800 = vmatprep.subr.mxu0 0.0
        %801 = vmatpush1.msra.mxu0 0.0
        %802 = vmatprep.subr.mxu0 0.0
        %803 = vmatpush1.msra.mxu0 0.0
        %804 = vmatprep.subr.mxu0 0.0
        %805 = vmatpush1.msra.mxu0 0.0
        %806 = vmatprep.subr.mxu0 0.0
        %807 = vmatpush1.msra.mxu0 0.0
        %808 = vmatprep.subr.mxu0 0.0
        %809 = vmatpush1.msra.mxu0 0.0
        %810 = vmatprep.subr.mxu0 0.0
        %811 = vmatpush1.msra.mxu0 0.0
        %812 = vmatprep.subr.mxu0 0.0
        %813 = vmatpush1.msra.mxu0 0.0
        %814 = vmatprep.subr.mxu0 0.0
        %815 = vmatpush1.msra.mxu0 0.0
        %816 = vmatprep.subr.mxu0 0.0
        %817 = vmatpush1.msra.mxu0 0.0
        %818 = vmatprep.subr.mxu0 0.0
        %819 = vmatpush1.msra.mxu0 0.0
        %820 = vmatprep.subr.mxu0 0.0
        %821 = vmatpush1.msra.mxu0 0.0
        %822 = vmatprep.mubr.f32.mxu0 0.0
        %823 = vmatmul.mubr.f32.gmra.mrb[0].mxu0 %v756
        %v824 = vpop.f32.mrb[0].mxu0
        %v825 = vadd.f32 0.0, %v824
        %v826 = vpop.f32.mrb[0].mxu0
        %827 = vdwg.mxu0
        %v828 = vmul.f32 %v825, 0.8838835
        %v829 = vadd.f32 %v828, -1.25
        %v830 = vtanh.pop %v829
        %v831 = vmul.f32 %v830, 0.5
        %v832 = vadd.f32 %v831, 0.5
        %833 = vst [vmem:[%s352] sm:$0xff] %v832
        %v834 = vld [vmem:[#allocation2 + $0x8] sm:$0xff]
        %835 = vrot.lane.b32.xlu0 %v752, 120
        %v836 = vpop.permute.xlu0 %835
        %v837 = vsel %vm754, %v836, 0
        %839 = vmatprep.subr.mxu0 0.0
        %840 = vmatpush1.msra.mxu0 %v834
        %841 = vmatprep.subr.mxu0 0.0
        %842 = vmatpush1.msra.mxu0 0.0
        %843 = vmatprep.subr.mxu0 0.0
        %844 = vmatpush1.msra.mxu0 0.0
        %845 = vmatprep.subr.mxu0 0.0
        %846 = vmatpush1.msra.mxu0 0.0
        %847 = vmatprep.subr.mxu0 0.0
        %848 = vmatpush1.msra.mxu0 0.0
        %849 = vmatprep.subr.mxu0 0.0
        %850 = vmatpush1.msra.mxu0 0.0
        %851 = vmatprep.subr.mxu0 0.0
        %852 = vmatpush1.msra.mxu0 0.0
        %853 = vmatprep.subr.mxu0 0.0
        %854 = vmatpush1.msra.mxu0 0.0
        %855 = vmatprep.subr.mxu0 0.0
        %856 = vmatpush1.msra.mxu0 0.0
        %857 = vmatprep.subr.mxu0 0.0
        %858 = vmatpush1.msra.mxu0 0.0
        %859 = vmatprep.subr.mxu0 0.0
        %860 = vmatpush1.msra.mxu0 0.0
        %861 = vmatprep.subr.mxu0 0.0
        %862 = vmatpush1.msra.mxu0 0.0
        %863 = vmatprep.subr.mxu0 0.0
        %864 = vmatpush1.msra.mxu0 0.0
        %865 = vmatprep.subr.mxu0 0.0
        %866 = vmatpush1.msra.mxu0 0.0
        %867 = vmatprep.subr.mxu0 0.0
        %868 = vmatpush1.msra.mxu0 0.0
        %869 = vmatprep.subr.mxu0 0.0
        %870 = vmatpush1.msra.mxu0 0.0
        %871 = vmatprep.subr.mxu0 0.0
        %872 = vmatpush1.msra.mxu0 0.0
        %873 = vmatprep.subr.mxu0 0.0
        %874 = vmatpush1.msra.mxu0 0.0
        %875 = vmatprep.subr.mxu0 0.0
        %876 = vmatpush1.msra.mxu0 0.0
        %877 = vmatprep.subr.mxu0 0.0
        %878 = vmatpush1.msra.mxu0 0.0
        %879 = vmatprep.subr.mxu0 0.0
        %880 = vmatpush1.msra.mxu0 0.0
        %881 = vmatprep.subr.mxu0 0.0
        %882 = vmatpush1.msra.mxu0 0.0
        %883 = vmatprep.subr.mxu0 0.0
        %884 = vmatpush1.msra.mxu0 0.0
        %885 = vmatprep.subr.mxu0 0.0
        %886 = vmatpush1.msra.mxu0 0.0
        %887 = vmatprep.subr.mxu0 0.0
        %888 = vmatpush1.msra.mxu0 0.0
        %889 = vmatprep.subr.mxu0 0.0
        %890 = vmatpush1.msra.mxu0 0.0
        %891 = vmatprep.subr.mxu0 0.0
        %892 = vmatpush1.msra.mxu0 0.0
        %893 = vmatprep.subr.mxu0 0.0
        %894 = vmatpush1.msra.mxu0 0.0
        %895 = vmatprep.subr.mxu0 0.0
        %896 = vmatpush1.msra.mxu0 0.0
        %897 = vmatprep.subr.mxu0 0.0
        %898 = vmatpush1.msra.mxu0 0.0
        %899 = vmatprep.subr.mxu0 0.0
        %900 = vmatpush1.msra.mxu0 0.0
        %901 = vmatprep.subr.mxu0 0.0
        %902 = vmatpush1.msra.mxu0 0.0
        %903 = vmatprep.mubr.f32.mxu0 0.0
        %904 = vmatmul.mubr.f32.gmra.mrb[0].mxu0 %v837
        %v905 = vpop.f32.mrb[0].mxu0
        %v906 = vadd.f32 0.0, %v905
        %v907 = vpop.f32.mrb[0].mxu0
        %908 = vdwg.mxu0
        %v909 = vmul.f32 %v906, 0.8838835
        %v910 = vadd.f32 %v909, -1.25
        %v911 = vtanh.pop %v910
        %v912 = vmul.f32 %v911, 0.5
        %v913 = vadd.f32 %v912, 0.5
        %s914 = scalar_lea.vmem %s352, 8 [#allocation11]
        %915 = vst [vmem:[%s914] sm:$0xff] %v913
        %v916 = vld [vmem:[#allocation2 + $0x10] sm:$0xff]
        %917 = vrot.lane.b32.xlu0 %v752, 112
        %v918 = vpop.permute.xlu0 %917
        %v919 = vsel %vm754, %v918, 0
        %921 = vmatprep.subr.mxu0 0.0
        %922 = vmatpush1.msra.mxu0 %v916
        %923 = vmatprep.subr.mxu0 0.0
        %924 = vmatpush1.msra.mxu0 0.0
        %925 = vmatprep.subr.mxu0 0.0
        %926 = vmatpush1.msra.mxu0 0.0
        %927 = vmatprep.subr.mxu0 0.0
        %928 = vmatpush1.msra.mxu0 0.0
        %929 = vmatprep.subr.mxu0 0.0
        %930 = vmatpush1.msra.mxu0 0.0
        %931 = vmatprep.subr.mxu0 0.0
        %932 = vmatpush1.msra.mxu0 0.0
        %933 = vmatprep.subr.mxu0 0.0
        %934 = vmatpush1.msra.mxu0 0.0
        %935 = vmatprep.subr.mxu0 0.0
        %936 = vmatpush1.msra.mxu0 0.0
        %937 = vmatprep.subr.mxu0 0.0
        %938 = vmatpush1.msra.mxu0 0.0
        %939 = vmatprep.subr.mxu0 0.0
        %940 = vmatpush1.msra.mxu0 0.0
        %941 = vmatprep.subr.mxu0 0.0
        %942 = vmatpush1.msra.mxu0 0.0
        %943 = vmatprep.subr.mxu0 0.0
        %944 = vmatpush1.msra.mxu0 0.0
        %945 = vmatprep.subr.mxu0 0.0
        %946 = vmatpush1.msra.mxu0 0.0
        %947 = vmatprep.subr.mxu0 0.0
        %948 = vmatpush1.msra.mxu0 0.0
        %949 = vmatprep.subr.mxu0 0.0
        %950 = vmatpush1.msra.mxu0 0.0
        %951 = vmatprep.subr.mxu0 0.0
        %952 = vmatpush1.msra.mxu0 0.0
        %953 = vmatprep.subr.mxu0 0.0
        %954 = vmatpush1.msra.mxu0 0.0
        %955 = vmatprep.subr.mxu0 0.0
        %956 = vmatpush1.msra.mxu0 0.0
        %957 = vmatprep.subr.mxu0 0.0
        %958 = vmatpush1.msra.mxu0 0.0
        %959 = vmatprep.subr.mxu0 0.0
        %960 = vmatpush1.msra.mxu0 0.0
        %961 = vmatprep.subr.mxu0 0.0
        %962 = vmatpush1.msra.mxu0 0.0
        %963 = vmatprep.subr.mxu0 0.0
        %964 = vmatpush1.msra.mxu0 0.0
        %965 = vmatprep.subr.mxu0 0.0
        %966 = vmatpush1.msra.mxu0 0.0
        %967 = vmatprep.subr.mxu0 0.0
        %968 = vmatpush1.msra.mxu0 0.0
        %969 = vmatprep.subr.mxu0 0.0
        %970 = vmatpush1.msra.mxu0 0.0
        %971 = vmatprep.subr.mxu0 0.0
        %972 = vmatpush1.msra.mxu0 0.0
        %973 = vmatprep.subr.mxu0 0.0
        %974 = vmatpush1.msra.mxu0 0.0
        %975 = vmatprep.subr.mxu0 0.0
        %976 = vmatpush1.msra.mxu0 0.0
        %977 = vmatprep.subr.mxu0 0.0
        %978 = vmatpush1.msra.mxu0 0.0
        %979 = vmatprep.subr.mxu0 0.0
        %980 = vmatpush1.msra.mxu0 0.0
        %981 = vmatprep.subr.mxu0 0.0
        %982 = vmatpush1.msra.mxu0 0.0
        %983 = vmatprep.subr.mxu0 0.0
        %984 = vmatpush1.msra.mxu0 0.0
        %985 = vmatprep.mubr.f32.mxu0 0.0
        %986 = vmatmul.mubr.f32.gmra.mrb[0].mxu0 %v919
        %v987 = vpop.f32.mrb[0].mxu0
        %v988 = vadd.f32 0.0, %v987
        %v989 = vpop.f32.mrb[0].mxu0
        %990 = vdwg.mxu0
        %v991 = vmul.f32 %v988, 0.8838835
        %v992 = vadd.f32 %v991, -1.25
        %v993 = vtanh.pop %v992
        %v994 = vmul.f32 %v993, 0.5
        %v995 = vadd.f32 %v994, 0.5
        %s996 = scalar_lea.vmem %s352, 16 [#allocation11]
        %997 = vst [vmem:[%s996] sm:$0xff] %v995
        %v998 = vld [vmem:[#allocation2 + $0x18] sm:$0xff]
        %999 = vrot.lane.b32.xlu0 %v752, 104
        %v1000 = vpop.permute.xlu0 %999
        %v1001 = vsel %vm754, %v1000, 0
        %1003 = vmatprep.subr.mxu0 0.0
        %1004 = vmatpush1.msra.mxu0 %v998
        %1005 = vmatprep.subr.mxu0 0.0
        %1006 = vmatpush1.msra.mxu0 0.0
        %1007 = vmatprep.subr.mxu0 0.0
        %1008 = vmatpush1.msra.mxu0 0.0
        %1009 = vmatprep.subr.mxu0 0.0
        %1010 = vmatpush1.msra.mxu0 0.0
        %1011 = vmatprep.subr.mxu0 0.0
        %1012 = vmatpush1.msra.mxu0 0.0
        %1013 = vmatprep.subr.mxu0 0.0
        %1014 = vmatpush1.msra.mxu0 0.0
        %1015 = vmatprep.subr.mxu0 0.0
        %1016 = vmatpush1.msra.mxu0 0.0
        %1017 = vmatprep.subr.mxu0 0.0
        %1018 = vmatpush1.msra.mxu0 0.0
        %1019 = vmatprep.subr.mxu0 0.0
        %1020 = vmatpush1.msra.mxu0 0.0
        %1021 = vmatprep.subr.mxu0 0.0
        %1022 = vmatpush1.msra.mxu0 0.0
        %1023 = vmatprep.subr.mxu0 0.0
        %1024 = vmatpush1.msra.mxu0 0.0
        %1025 = vmatprep.subr.mxu0 0.0
        %1026 = vmatpush1.msra.mxu0 0.0
        %1027 = vmatprep.subr.mxu0 0.0
        %1028 = vmatpush1.msra.mxu0 0.0
        %1029 = vmatprep.subr.mxu0 0.0
        %1030 = vmatpush1.msra.mxu0 0.0
        %1031 = vmatprep.subr.mxu0 0.0
        %1032 = vmatpush1.msra.mxu0 0.0
        %1033 = vmatprep.subr.mxu0 0.0
        %1034 = vmatpush1.msra.mxu0 0.0
        %1035 = vmatprep.subr.mxu0 0.0
        %1036 = vmatpush1.msra.mxu0 0.0
        %1037 = vmatprep.subr.mxu0 0.0
        %1038 = vmatpush1.msra.mxu0 0.0
        %1039 = vmatprep.subr.mxu0 0.0
        %1040 = vmatpush1.msra.mxu0 0.0
        %1041 = vmatprep.subr.mxu0 0.0
        %1042 = vmatpush1.msra.mxu0 0.0
        %1043 = vmatprep.subr.mxu0 0.0
        %1044 = vmatpush1.msra.mxu0 0.0
        %1045 = vmatprep.subr.mxu0 0.0
        %1046 = vmatpush1.msra.mxu0 0.0
        %1047 = vmatprep.subr.mxu0 0.0
        %1048 = vmatpush1.msra.mxu0 0.0
        %1049 = vmatprep.subr.mxu0 0.0
        %1050 = vmatpush1.msra.mxu0 0.0
        %1051 = vmatprep.subr.mxu0 0.0
        %1052 = vmatpush1.msra.mxu0 0.0
        %1053 = vmatprep.subr.mxu0 0.0
        %1054 = vmatpush1.msra.mxu0 0.0
        %1055 = vmatprep.subr.mxu0 0.0
        %1056 = vmatpush1.msra.mxu0 0.0
        %1057 = vmatprep.subr.mxu0 0.0
        %1058 = vmatpush1.msra.mxu0 0.0
        %1059 = vmatprep.subr.mxu0 0.0
        %1060 = vmatpush1.msra.mxu0 0.0
        %1061 = vmatprep.subr.mxu0 0.0
        %1062 = vmatpush1.msra.mxu0 0.0
        %1063 = vmatprep.subr.mxu0 0.0
        %1064 = vmatpush1.msra.mxu0 0.0
        %1065 = vmatprep.subr.mxu0 0.0
        %1066 = vmatpush1.msra.mxu0 0.0
        %1067 = vmatprep.mubr.f32.mxu0 0.0
        %1068 = vmatmul.mubr.f32.gmra.mrb[0].mxu0 %v1001
        %v1069 = vpop.f32.mrb[0].mxu0
        %v1070 = vadd.f32 0.0, %v1069
        %v1071 = vpop.f32.mrb[0].mxu0
        %1072 = vdwg.mxu0
        %v1073 = vmul.f32 %v1070, 0.8838835
        %v1074 = vadd.f32 %v1073, -1.25
        %v1075 = vtanh.pop %v1074
        %v1076 = vmul.f32 %v1075, 0.5
        %v1077 = vadd.f32 %v1076, 0.5
        %s1078 = scalar_lea.vmem %s352, 24 [#allocation11]
        %1079 = vst [vmem:[%s1078] sm:$0xff] %v1077
        %s1080 = sand.u32 %s187, 1
        %s1081 = scalar_lea.sflag [#allocation5], %s1080
        %s1082 = sand.u32 %s187, 1
        %s1083 = smul.addr %s1082, 32
        %s1084 = scalar_lea.vmem [#allocation11], %s1083
        // Predicated region
        $region65: #{tpu_custom_call.1} parent=43 // pred_check
          %p1085 = pneg %p197
        $region66: #{tpu_custom_call.1} parent=43 // pred_check_branch
          %1087 = sbr.rel (%p1085) target = $region68
        $region67: #{tpu_custom_call.1} parent=43 // pred_region
          %s1089 = ssub.s32 512, 512
          %1090 = vsyncadd %s1081, %s1089
          %s1091 = smul.addr %s31, 4
          %s1092 = sadd.s32 %s32, %s1091
          %s1093 = smul.addr %s1092, 128
          %s1094 = scalar_lea.hbm %s6, %s1093
          %s1095 = sshll.u32 %s1084, 4
          %s1096 = int_to_ptr.vmem [resolvable:$true] %s1095
          %1101 = dma.vmem_to_hbm [thread:$0]  %s1096, 512, %s1094, %s1081, 128, 128, 8
        $region68: #{tpu_custom_call.1} parent=43 // pred_fallthru
          _
      $region44: #{tpu_custom_call.1} parent=5 // pred_fallthru
        _
      %p1102 = scmp.le.s32.totalorder 2, %s22
      // Predicated region
      $region69: #{tpu_custom_call.1} parent=5 // pred_check
        %p1103 = pneg %p1102
      $region70: #{tpu_custom_call.1} parent=5 // pred_check_branch
        %1105 = sbr.rel (%p1103) target = $region72
      $region71: #{tpu_custom_call.1} parent=5 // pred_region
        %s1106 = ssub.s32 %s22, 2
        // Predicated region
        $region73: #{tpu_custom_call.1} parent=71 // pred_check
          %p1107 = pneg %p203
        $region74: #{tpu_custom_call.1} parent=71 // pred_check_branch
          %1109 = sbr.rel (%p1107) target = $region76
        $region75: #{tpu_custom_call.1} parent=71 // pred_region
          %s1110 = sand.u32 %s188, 1
          %s1111 = scalar_lea.sflag [#allocation5], %s1110
          %s1112 = sand.u32 %s188, 1
          %s1113 = smul.addr %s1112, 32
          %s1114 = scalar_lea.vmem [#allocation11], %s1113
          %1115 = dma.done %s1111, 512
        $region76: #{tpu_custom_call.1} parent=71 // pred_fallthru
          _
      $region72: #{tpu_custom_call.1} parent=5 // pred_fallthru
        _
    $region6: #{tpu_custom_call.1} parent=1 // loop_footer
      %s26 = sadd.s32 1, %s22
    $region7: #{tpu_custom_call.1} parent=1 // loop_footer_branch
      %21 = sbr.rel target = $region3
    $region8: #{tpu_custom_call.1} parent=1 // loop_exit
      _
    %1116 = vsyncpa [#allocation4], 1
    %s1117 = scalar_lea.sflag [#allocation4], 1
    %1118 = vsyncpa %s1117, 1
    %1119 = vsyncpa [#allocation7], 1
    %s1120 = scalar_lea.sflag [#allocation7], 1
    %1121 = vsyncpa %s1120, 1
    %1122 = vsyncpa [#allocation10], 1
    %1123 = vsyncpa [#allocation5], 1
    %s1124 = scalar_lea.sflag [#allocation5], 1
    %1125 = vsyncpa %s1124, 1

</llo_original>
